<compile_context>
chip_gen: v5e
topology: v5e:2x2
jax: 0.10.0
libtpu: 0.0.40
codegen_flags: <defaults>
</compile_context>

<pallas_src>
import jax
import jax.numpy as jnp
from jax.experimental import pallas as pl
from jax.experimental.pallas import tpu as pltpu

N_CH = 6       # conv output channels
K = 3          # conv kernel size
HID = 32       # fc1 hidden size
OUT = 2        # fc2 output size
OUT_PAD = 128  # lane-dense padded output width


def cnn_kernel(e0_ref, o0_ref, e1_ref, o1_ref, cw_ref, cb_ref,
               w1_ref, b1_ref, w2_ref, b2_ref, out_ref, acc_ref):
    """One (batch-tile, K-tile) grid step.

    e0/o0/e1/o1 : (tB, tLp) f32 VMEM  de-interleaved (even/odd, +0/+1) signal
    cw_ref      : (6, 3)    f32 SMEM  conv weights (scalar reads)
    cb_ref      : (6,)      f32 SMEM  conv bias
    w1_ref      : (6, tLp, 32) f32 VMEM  fc1 weight rows for this K tile
    b1_ref      : (1, 32)   f32 VMEM
    w2_ref      : (32, 128) f32 VMEM  fc2 weight, zero-padded to 128 lanes
    b2_ref      : (1, 128)  f32 VMEM
    out_ref     : (tB, 128) f32 VMEM  written once, at the last K step
    acc_ref     : (tB, 32)  f32 VMEM scratch  fc1 pre-activation accumulator
    """
    k = pl.program_id(1)

    @pl.when(k == 0)
    def _init():
        acc_ref[...] = jnp.zeros_like(acc_ref)

    # Load the four lane-aligned signal views once; shared by all 6 channels.
    e0 = e0_ref[...]
    o0 = o0_ref[...]
    e1 = e1_ref[...]
    o1 = o1_ref[...]

    partial = None
    for c in range(N_CH):
        cw0 = cw_ref[c, 0]
        cw1 = cw_ref[c, 1]
        cw2 = cw_ref[c, 2]
        cbias = cb_ref[c]
        # conv output at even / odd positions (polyphase), then fused
        # ReLU+MaxPool(2,2) as a single vector max (relu(max) == max(relu)).
        conv_even = cw0 * e0 + cw1 * o0 + cw2 * e1 + cbias
        conv_odd = cw0 * o0 + cw1 * e1 + cw2 * o1 + cbias
        pooled = jnp.maximum(jnp.maximum(conv_even, conv_odd), 0.0)  # (tB, tLp)
        # fc1 partial sum for this channel / K tile (channel-major flatten order).
        contrib = jnp.dot(pooled, w1_ref[c], preferred_element_type=jnp.float32)
        partial = contrib if partial is None else partial + contrib

    acc_ref[...] += partial

    @pl.when(k == pl.num_programs(1) - 1)
    def _finalize():
        h = jnp.maximum(acc_ref[...] + b1_ref[...], 0.0)          # fc1 + ReLU
        out_ref[...] = (jnp.dot(h, w2_ref[...],
                                preferred_element_type=jnp.float32)
                        + b2_ref[...])                            # fc2 (padded)


def cnn_forward(x_ncw, cw, cb, w1, b1, w2, b2, *, tB=8, tLp=128):
    """x_ncw: (B, 1, L) float32 (PyTorch NCW layout)."""
    B, C, L = x_ncw.shape
    assert C == 1 and L % 2 == 0
    Lp = L // 2

    nB = pl.cdiv(B, tB)
    nK = pl.cdiv(Lp, tLp)
    B_p = nB * tB
    Lp_p = nK * tLp

    # --- signal prep: pad, de-interleave into even/odd polyphase streams ----
    x = x_ncw[:, 0, :]                                # (B, L)
    xp = jnp.pad(x, ((0, 0), (1, 1)))                 # conv padding=1 -> (B, L+2)
    E = xp[:, 0::2]                                   # (B, Lp+1)  xp[2p]
    O = xp[:, 1::2]                                   # (B, Lp+1)  xp[2p+1]
    E0, E1 = E[:, :Lp], E[:, 1:Lp + 1]
    O0, O1 = O[:, :Lp], O[:, 1:Lp + 1]

    def _pad2(a):                                     # pad (B, Lp) -> (B_p, Lp_p)
        return jnp.pad(a, ((0, B_p - B), (0, Lp_p - Lp)))

    E0, E1, O0, O1 = _pad2(E0), _pad2(E1), _pad2(O0), _pad2(O1)

    # --- parameter prep -----------------------------------------------------
    # fc1 weight, channel-major: rows c*Lp + p  ->  (6, Lp, 32), zero-pad Lp.
    w1c = w1.T.reshape(N_CH, Lp, HID)
    w1c = jnp.pad(w1c, ((0, 0), (0, Lp_p - Lp), (0, 0)))
    b1r = b1.reshape(1, HID)
    # fc2 padded to 128 output lanes so the final store is lane-dense.
    w2p = jnp.zeros((HID, OUT_PAD), jnp.float32).at[:, :OUT].set(w2.T)
    b2p = jnp.zeros((1, OUT_PAD), jnp.float32).at[:, :OUT].set(b2.reshape(1, OUT))

    # --- specs ---------------------------------------------------------------
    x_spec = pl.BlockSpec((tB, tLp), lambda b, k: (b, k))
    smem = pl.BlockSpec(memory_space=pltpu.MemorySpace.SMEM)

    in_specs = [
        x_spec, x_spec, x_spec, x_spec,                              # E0 O0 E1 O1
        smem, smem,                                                  # cw cb
        pl.BlockSpec((N_CH, tLp, HID), lambda b, k: (0, k, 0)),      # w1c K tile
        pl.BlockSpec((1, HID), lambda b, k: (0, 0)),                 # b1
        pl.BlockSpec((HID, OUT_PAD), lambda b, k: (0, 0)),           # w2 (padded)
        pl.BlockSpec((1, OUT_PAD), lambda b, k: (0, 0)),             # b2 (padded)
    ]
    out_spec = pl.BlockSpec((tB, OUT_PAD), lambda b, k: (b, 0))

    args = (E0, O0, E1, O1, cw, cb, w1c, b1r, w2p, b2p)
    bytes_accessed = int(sum(a.size * a.dtype.itemsize for a in args)
                         + B_p * OUT_PAD * 4)
    flops = int(B * (N_CH * K * 2 * L + 2 * (N_CH * Lp) * HID + 2 * HID * OUT))

    out = pl.pallas_call(
        cnn_kernel,
        out_shape=jax.ShapeDtypeStruct((B_p, OUT_PAD), jnp.float32),
        grid_spec=pltpu.PrefetchScalarGridSpec(
            num_scalar_prefetch=0,
            grid=(nB, nK),
            in_specs=in_specs,
            out_specs=out_spec,
            scratch_shapes=[pltpu.VMEM((tB, HID), jnp.float32)],
        ),
        compiler_params=pltpu.CompilerParams(
            dimension_semantics=("parallel", "arbitrary"),
            vmem_limit_bytes=32 * 1024 * 1024,
        ),
        cost_estimate=pl.CostEstimate(flops=flops, transcendentals=0,
                                      bytes_accessed=bytes_accessed),
    )(*args)

    return out[:B, :OUT]


def ref_forward(x_ncw, cw, cb, w1, b1, w2, b2):
    """Pure-JAX reference matching torch semantics."""
    B, _, L = x_ncw.shape
    Lp = L // 2
    x = x_ncw[:, 0, :]
    xp = jnp.pad(x, ((0, 0), (1, 1)))
    conv = jnp.stack(
        [cw[c, 0] * xp[:, 0:L] + cw[c, 1] * xp[:, 1:L + 1]
         + cw[c, 2] * xp[:, 2:L + 2] + cb[c] for c in range(N_CH)],
        axis=1)                                       # (B, 6, L)
    conv = jnp.maximum(conv, 0.0)
    pooled = jnp.max(conv.reshape(B, N_CH, Lp, 2), axis=-1)
    feats = pooled.reshape(B, N_CH * Lp)
    h = jnp.maximum(feats @ w1.T + b1, 0.0)
    return h @ w2.T + b2


if __name__ == "__main__":
    B, L = 16, 512                       # small-shape stand-in (real L = 41544)
    Lp = L // 2
    FC_IN = N_CH * Lp

    key = jax.random.PRNGKey(0)
    kx, kcw, kcb, kw1, kb1, kw2, kb2 = jax.random.split(key, 7)

    x = jax.random.normal(kx, (B, 1, L), dtype=jnp.float32)

    # Deterministic synthetic parameters (same shapes as the nn module, scaled L).
    cw = 0.3 * jax.random.normal(kcw, (N_CH, K), dtype=jnp.float32)      # conv1.weight (6,1,3) squeezed
    cb = 0.1 * jax.random.normal(kcb, (N_CH,), dtype=jnp.float32)        # conv1.bias
    w1 = 0.05 * jax.random.normal(kw1, (HID, FC_IN), dtype=jnp.float32)  # fc1.weight
    b1 = 0.1 * jax.random.normal(kb1, (HID,), dtype=jnp.float32)         # fc1.bias
    w2 = 0.05 * jax.random.normal(kw2, (OUT, HID), dtype=jnp.float32)    # fc2.weight
    b2 = 0.1 * jax.random.normal(kb2, (OUT,), dtype=jnp.float32)         # fc2.bias

    out = cnn_forward(x, cw, cb, w1, b1, w2, b2)
    out = jax.block_until_ready(out)

    ref = ref_forward(x, cw, cb, w1, b1, w2, b2)
    assert out.shape == (B, OUT)
    assert jnp.allclose(out, ref, atol=2e-3, rtol=2e-3), (out, ref)

    print("KERNEL_OK")
</pallas_src>

<mosaic_0001>
module attributes {stable_mosaic.version = 11 : i64} {
  func.func @cnn_kernel(%arg0: i32, %arg1: i32, %arg2: memref<8x128xf32, #tpu.memory_space<vmem>>, %arg3: memref<8x128xf32, #tpu.memory_space<vmem>>, %arg4: memref<8x128xf32, #tpu.memory_space<vmem>>, %arg5: memref<8x128xf32, #tpu.memory_space<vmem>>, %arg6: memref<6x3xf32, #tpu.memory_space<smem>>, %arg7: memref<6xf32, #tpu.memory_space<smem>>, %arg8: memref<6x128x32xf32, #tpu.memory_space<vmem>>, %arg9: memref<1x32xf32, #tpu.memory_space<vmem>>, %arg10: memref<32x128xf32, #tpu.memory_space<vmem>>, %arg11: memref<1x128xf32, #tpu.memory_space<vmem>>, %arg12: memref<8x128xf32, #tpu.memory_space<vmem>>, %arg13: memref<8x32xf32, #tpu.memory_space<vmem>>) attributes {dimension_semantics = [#tpu.dimension_semantics<parallel>, #tpu.dimension_semantics<arbitrary>], iteration_bounds = array<i64: 2, 2>, scalar_prefetch = 0 : i64, scratch_operands = 1 : i64, tpu.core_type = #tpu.core_type<tc>, window_params = [{transform_indices = @transform_0, window_bounds = array<i64: 8, 128>}, {transform_indices = @transform_1, window_bounds = array<i64: 8, 128>}, {transform_indices = @transform_2, window_bounds = array<i64: 8, 128>}, {transform_indices = @transform_3, window_bounds = array<i64: 8, 128>}, {transform_indices = @transform_4, window_bounds = array<i64: 6, 3>}, {transform_indices = @transform_5, window_bounds = array<i64: 6>}, {transform_indices = @transform_6, window_bounds = array<i64: 6, 128, 32>}, {pipeline_mode = #tpu.pipeline_mode<synchronous>, transform_indices = @transform_7, window_bounds = array<i64: 1, 32>}, {pipeline_mode = #tpu.pipeline_mode<synchronous>, transform_indices = @transform_8, window_bounds = array<i64: 32, 128>}, {pipeline_mode = #tpu.pipeline_mode<synchronous>, transform_indices = @transform_9, window_bounds = array<i64: 1, 128>}, {transform_indices = @transform_10, window_bounds = array<i64: 8, 128>}]} {
    %c0_i32 = arith.constant 0 : i32
    %0 = arith.cmpi eq, %arg1, %c0_i32 : i32
    %1 = arith.extui %0 : i1 to i32
    %c0_i32_0 = arith.constant 0 : i32
    %2 = arith.cmpi ne, %1, %c0_i32_0 : i32
    scf.if %2 {
      %cst_79 = arith.constant 0.000000e+00 : f32
      %198 = vector.broadcast %cst_79 : f32 to vector<8x32xf32>
      %c0_80 = arith.constant 0 : index
      %c0_81 = arith.constant 0 : index
      %199 = vector.load %arg13[%c0_80, %c0_81] : memref<8x32xf32, #tpu.memory_space<vmem>>, vector<8x32xf32>
      tpu.vector_store %arg13[%c0_80, %c0_81], %198 {strides = array<i32>} : memref<8x32xf32, #tpu.memory_space<vmem>>, vector<8x32xf32>,
    } else {
    }
    %c0 = arith.constant 0 : index
    %c0_1 = arith.constant 0 : index
    %3 = vector.load %arg2[%c0, %c0_1] : memref<8x128xf32, #tpu.memory_space<vmem>>, vector<8x128xf32>
    %c0_2 = arith.constant 0 : index
    %c0_3 = arith.constant 0 : index
    %4 = vector.load %arg3[%c0_2, %c0_3] : memref<8x128xf32, #tpu.memory_space<vmem>>, vector<8x128xf32>
    %c0_4 = arith.constant 0 : index
    %c0_5 = arith.constant 0 : index
    %5 = vector.load %arg4[%c0_4, %c0_5] : memref<8x128xf32, #tpu.memory_space<vmem>>, vector<8x128xf32>
    %c0_6 = arith.constant 0 : index
    %c0_7 = arith.constant 0 : index
    %6 = vector.load %arg5[%c0_6, %c0_7] : memref<8x128xf32, #tpu.memory_space<vmem>>, vector<8x128xf32>
    %c0_8 = arith.constant 0 : index
    %c0_9 = arith.constant 0 : index
    %7 = memref.load %arg6[%c0_8, %c0_9] : memref<6x3xf32, #tpu.memory_space<smem>>
    %c0_10 = arith.constant 0 : index
    %c1 = arith.constant 1 : index
    %8 = memref.load %arg6[%c0_10, %c1] : memref<6x3xf32, #tpu.memory_space<smem>>
    %c0_11 = arith.constant 0 : index
    %c2 = arith.constant 2 : index
    %9 = memref.load %arg6[%c0_11, %c2] : memref<6x3xf32, #tpu.memory_space<smem>>
    %c0_12 = arith.constant 0 : index
    %10 = memref.load %arg7[%c0_12] : memref<6xf32, #tpu.memory_space<smem>>
    %11 = vector.broadcast %7 : f32 to vector<8x128xf32>
    %12 = arith.mulf %11, %3 : vector<8x128xf32>
    %13 = vector.broadcast %8 : f32 to vector<8x128xf32>
    %14 = arith.mulf %13, %4 : vector<8x128xf32>
    %15 = arith.addf %12, %14 : vector<8x128xf32>
    %16 = vector.broadcast %9 : f32 to vector<8x128xf32>
    %17 = arith.mulf %16, %5 : vector<8x128xf32>
    %18 = arith.addf %15, %17 : vector<8x128xf32>
    %19 = vector.broadcast %10 : f32 to vector<8x128xf32>
    %20 = arith.addf %18, %19 : vector<8x128xf32>
    %21 = vector.broadcast %7 : f32 to vector<8x128xf32>
    %22 = arith.mulf %21, %4 : vector<8x128xf32>
    %23 = vector.broadcast %8 : f32 to vector<8x128xf32>
    %24 = arith.mulf %23, %5 : vector<8x128xf32>
    %25 = arith.addf %22, %24 : vector<8x128xf32>
    %26 = vector.broadcast %9 : f32 to vector<8x128xf32>
    %27 = arith.mulf %26, %6 : vector<8x128xf32>
    %28 = arith.addf %25, %27 : vector<8x128xf32>
    %29 = vector.broadcast %10 : f32 to vector<8x128xf32>
    %30 = arith.addf %28, %29 : vector<8x128xf32>
    %31 = arith.maximumf %20, %30 : vector<8x128xf32>
    %cst = arith.constant 0.000000e+00 : f32
    %32 = vector.broadcast %cst : f32 to vector<8x128xf32>
    %33 = arith.maximumf %31, %32 : vector<8x128xf32>
    %c0_13 = arith.constant 0 : index
    %c0_14 = arith.constant 0 : index
    %c0_15 = arith.constant 0 : index
    %34 = vector.load %arg8[%c0_13, %c0_14, %c0_15] : memref<6x128x32xf32, #tpu.memory_space<vmem>>, vector<1x128x32xf32>
    %35 = vector.shape_cast %34 : vector<1x128x32xf32> to vector<128x32xf32>
    %cst_16 = arith.constant dense<0.000000e+00> : vector<8x32xf32>
    %36 = tpu.matmul %33, %35, %cst_16 {dimension_numbers = #tpu.dot_dimension_numbers<[1], [0], [0], [1], [0, 0, 1, 1], [], []>} : vector<8x128xf32>, vector<128x32xf32>, vector<8x32xf32> -> vector<8x32xf32>
    %c1_17 = arith.constant 1 : index
    %c0_18 = arith.constant 0 : index
    %37 = memref.load %arg6[%c1_17, %c0_18] : memref<6x3xf32, #tpu.memory_space<smem>>
    %c1_19 = arith.constant 1 : index
    %c1_20 = arith.constant 1 : index
    %38 = memref.load %arg6[%c1_19, %c1_20] : memref<6x3xf32, #tpu.memory_space<smem>>
    %c1_21 = arith.constant 1 : index
    %c2_22 = arith.constant 2 : index
    %39 = memref.load %arg6[%c1_21, %c2_22] : memref<6x3xf32, #tpu.memory_space<smem>>
    %c1_23 = arith.constant 1 : index
    %40 = memref.load %arg7[%c1_23] : memref<6xf32, #tpu.memory_space<smem>>
    %41 = vector.broadcast %37 : f32 to vector<8x128xf32>
    %42 = arith.mulf %41, %3 : vector<8x128xf32>
    %43 = vector.broadcast %38 : f32 to vector<8x128xf32>
    %44 = arith.mulf %43, %4 : vector<8x128xf32>
    %45 = arith.addf %42, %44 : vector<8x128xf32>
    %46 = vector.broadcast %39 : f32 to vector<8x128xf32>
    %47 = arith.mulf %46, %5 : vector<8x128xf32>
    %48 = arith.addf %45, %47 : vector<8x128xf32>
    %49 = vector.broadcast %40 : f32 to vector<8x128xf32>
    %50 = arith.addf %48, %49 : vector<8x128xf32>
    %51 = vector.broadcast %37 : f32 to vector<8x128xf32>
    %52 = arith.mulf %51, %4 : vector<8x128xf32>
    %53 = vector.broadcast %38 : f32 to vector<8x128xf32>
    %54 = arith.mulf %53, %5 : vector<8x128xf32>
    %55 = arith.addf %52, %54 : vector<8x128xf32>
    %56 = vector.broadcast %39 : f32 to vector<8x128xf32>
    %57 = arith.mulf %56, %6 : vector<8x128xf32>
    %58 = arith.addf %55, %57 : vector<8x128xf32>
    %59 = vector.broadcast %40 : f32 to vector<8x128xf32>
    %60 = arith.addf %58, %59 : vector<8x128xf32>
    %61 = arith.maximumf %50, %60 : vector<8x128xf32>
    %cst_24 = arith.constant 0.000000e+00 : f32
    %62 = vector.broadcast %cst_24 : f32 to vector<8x128xf32>
    %63 = arith.maximumf %61, %62 : vector<8x128xf32>
    %c1_25 = arith.constant 1 : index
    %c0_26 = arith.constant 0 : index
    %c0_27 = arith.constant 0 : index
    %64 = vector.load %arg8[%c1_25, %c0_26, %c0_27] : memref<6x128x32xf32, #tpu.memory_space<vmem>>, vector<1x128x32xf32>
    %65 = vector.shape_cast %64 : vector<1x128x32xf32> to vector<128x32xf32>
    %cst_28 = arith.constant dense<0.000000e+00> : vector<8x32xf32>
    %66 = tpu.matmul %63, %65, %cst_28 {dimension_numbers = #tpu.dot_dimension_numbers<[1], [0], [0], [1], [0, 0, 1, 1], [], []>} : vector<8x128xf32>, vector<128x32xf32>, vector<8x32xf32> -> vector<8x32xf32>
    %67 = arith.addf %36, %66 : vector<8x32xf32>
    %c2_29 = arith.constant 2 : index
    %c0_30 = arith.constant 0 : index
    %68 = memref.load %arg6[%c2_29, %c0_30] : memref<6x3xf32, #tpu.memory_space<smem>>
    %c2_31 = arith.constant 2 : index
    %c1_32 = arith.constant 1 : index
    %69 = memref.load %arg6[%c2_31, %c1_32] : memref<6x3xf32, #tpu.memory_space<smem>>
    %c2_33 = arith.constant 2 : index
    %c2_34 = arith.constant 2 : index
    %70 = memref.load %arg6[%c2_33, %c2_34] : memref<6x3xf32, #tpu.memory_space<smem>>
    %c2_35 = arith.constant 2 : index
    %71 = memref.load %arg7[%c2_35] : memref<6xf32, #tpu.memory_space<smem>>
    %72 = vector.broadcast %68 : f32 to vector<8x128xf32>
    %73 = arith.mulf %72, %3 : vector<8x128xf32>
    %74 = vector.broadcast %69 : f32 to vector<8x128xf32>
    %75 = arith.mulf %74, %4 : vector<8x128xf32>
    %76 = arith.addf %73, %75 : vector<8x128xf32>
    %77 = vector.broadcast %70 : f32 to vector<8x128xf32>
    %78 = arith.mulf %77, %5 : vector<8x128xf32>
    %79 = arith.addf %76, %78 : vector<8x128xf32>
    %80 = vector.broadcast %71 : f32 to vector<8x128xf32>
    %81 = arith.addf %79, %80 : vector<8x128xf32>
    %82 = vector.broadcast %68 : f32 to vector<8x128xf32>
    %83 = arith.mulf %82, %4 : vector<8x128xf32>
    %84 = vector.broadcast %69 : f32 to vector<8x128xf32>
    %85 = arith.mulf %84, %5 : vector<8x128xf32>
    %86 = arith.addf %83, %85 : vector<8x128xf32>
    %87 = vector.broadcast %70 : f32 to vector<8x128xf32>
    %88 = arith.mulf %87, %6 : vector<8x128xf32>
    %89 = arith.addf %86, %88 : vector<8x128xf32>
    %90 = vector.broadcast %71 : f32 to vector<8x128xf32>
    %91 = arith.addf %89, %90 : vector<8x128xf32>
    %92 = arith.maximumf %81, %91 : vector<8x128xf32>
    %cst_36 = arith.constant 0.000000e+00 : f32
    %93 = vector.broadcast %cst_36 : f32 to vector<8x128xf32>
    %94 = arith.maximumf %92, %93 : vector<8x128xf32>
    %c2_37 = arith.constant 2 : index
    %c0_38 = arith.constant 0 : index
    %c0_39 = arith.constant 0 : index
    %95 = vector.load %arg8[%c2_37, %c0_38, %c0_39] : memref<6x128x32xf32, #tpu.memory_space<vmem>>, vector<1x128x32xf32>
    %96 = vector.shape_cast %95 : vector<1x128x32xf32> to vector<128x32xf32>
    %cst_40 = arith.constant dense<0.000000e+00> : vector<8x32xf32>
    %97 = tpu.matmul %94, %96, %cst_40 {dimension_numbers = #tpu.dot_dimension_numbers<[1], [0], [0], [1], [0, 0, 1, 1], [], []>} : vector<8x128xf32>, vector<128x32xf32>, vector<8x32xf32> -> vector<8x32xf32>
    %98 = arith.addf %67, %97 : vector<8x32xf32>
    %c3 = arith.constant 3 : index
    %c0_41 = arith.constant 0 : index
    %99 = memref.load %arg6[%c3, %c0_41] : memref<6x3xf32, #tpu.memory_space<smem>>
    %c3_42 = arith.constant 3 : index
    %c1_43 = arith.constant 1 : index
    %100 = memref.load %arg6[%c3_42, %c1_43] : memref<6x3xf32, #tpu.memory_space<smem>>
    %c3_44 = arith.constant 3 : index
    %c2_45 = arith.constant 2 : index
    %101 = memref.load %arg6[%c3_44, %c2_45] : memref<6x3xf32, #tpu.memory_space<smem>>
    %c3_46 = arith.constant 3 : index
    %102 = memref.load %arg7[%c3_46] : memref<6xf32, #tpu.memory_space<smem>>
    %103 = vector.broadcast %99 : f32 to vector<8x128xf32>
    %104 = arith.mulf %103, %3 : vector<8x128xf32>
    %105 = vector.broadcast %100 : f32 to vector<8x128xf32>
    %106 = arith.mulf %105, %4 : vector<8x128xf32>
    %107 = arith.addf %104, %106 : vector<8x128xf32>
    %108 = vector.broadcast %101 : f32 to vector<8x128xf32>
    %109 = arith.mulf %108, %5 : vector<8x128xf32>
    %110 = arith.addf %107, %109 : vector<8x128xf32>
    %111 = vector.broadcast %102 : f32 to vector<8x128xf32>
    %112 = arith.addf %110, %111 : vector<8x128xf32>
    %113 = vector.broadcast %99 : f32 to vector<8x128xf32>
    %114 = arith.mulf %113, %4 : vector<8x128xf32>
    %115 = vector.broadcast %100 : f32 to vector<8x128xf32>
    %116 = arith.mulf %115, %5 : vector<8x128xf32>
    %117 = arith.addf %114, %116 : vector<8x128xf32>
    %118 = vector.broadcast %101 : f32 to vector<8x128xf32>
    %119 = arith.mulf %118, %6 : vector<8x128xf32>
    %120 = arith.addf %117, %119 : vector<8x128xf32>
    %121 = vector.broadcast %102 : f32 to vector<8x128xf32>
    %122 = arith.addf %120, %121 : vector<8x128xf32>
    %123 = arith.maximumf %112, %122 : vector<8x128xf32>
    %cst_47 = arith.constant 0.000000e+00 : f32
    %124 = vector.broadcast %cst_47 : f32 to vector<8x128xf32>
    %125 = arith.maximumf %123, %124 : vector<8x128xf32>
    %c3_48 = arith.constant 3 : index
    %c0_49 = arith.constant 0 : index
    %c0_50 = arith.constant 0 : index
    %126 = vector.load %arg8[%c3_48, %c0_49, %c0_50] : memref<6x128x32xf32, #tpu.memory_space<vmem>>, vector<1x128x32xf32>
    %127 = vector.shape_cast %126 : vector<1x128x32xf32> to vector<128x32xf32>
    %cst_51 = arith.constant dense<0.000000e+00> : vector<8x32xf32>
    %128 = tpu.matmul %125, %127, %cst_51 {dimension_numbers = #tpu.dot_dimension_numbers<[1], [0], [0], [1], [0, 0, 1, 1], [], []>} : vector<8x128xf32>, vector<128x32xf32>, vector<8x32xf32> -> vector<8x32xf32>
    %129 = arith.addf %98, %128 : vector<8x32xf32>
    %c4 = arith.constant 4 : index
    %c0_52 = arith.constant 0 : index
    %130 = memref.load %arg6[%c4, %c0_52] : memref<6x3xf32, #tpu.memory_space<smem>>
    %c4_53 = arith.constant 4 : index
    %c1_54 = arith.constant 1 : index
    %131 = memref.load %arg6[%c4_53, %c1_54] : memref<6x3xf32, #tpu.memory_space<smem>>
    %c4_55 = arith.constant 4 : index
    %c2_56 = arith.constant 2 : index
    %132 = memref.load %arg6[%c4_55, %c2_56] : memref<6x3xf32, #tpu.memory_space<smem>>
    %c4_57 = arith.constant 4 : index
    %133 = memref.load %arg7[%c4_57] : memref<6xf32, #tpu.memory_space<smem>>
    %134 = vector.broadcast %130 : f32 to vector<8x128xf32>
    %135 = arith.mulf %134, %3 : vector<8x128xf32>
    %136 = vector.broadcast %131 : f32 to vector<8x128xf32>
    %137 = arith.mulf %136, %4 : vector<8x128xf32>
    %138 = arith.addf %135, %137 : vector<8x128xf32>
    %139 = vector.broadcast %132 : f32 to vector<8x128xf32>
    %140 = arith.mulf %139, %5 : vector<8x128xf32>
    %141 = arith.addf %138, %140 : vector<8x128xf32>
    %142 = vector.broadcast %133 : f32 to vector<8x128xf32>
    %143 = arith.addf %141, %142 : vector<8x128xf32>
    %144 = vector.broadcast %130 : f32 to vector<8x128xf32>
    %145 = arith.mulf %144, %4 : vector<8x128xf32>
    %146 = vector.broadcast %131 : f32 to vector<8x128xf32>
    %147 = arith.mulf %146, %5 : vector<8x128xf32>
    %148 = arith.addf %145, %147 : vector<8x128xf32>
    %149 = vector.broadcast %132 : f32 to vector<8x128xf32>
    %150 = arith.mulf %149, %6 : vector<8x128xf32>
    %151 = arith.addf %148, %150 : vector<8x128xf32>
    %152 = vector.broadcast %133 : f32 to vector<8x128xf32>
    %153 = arith.addf %151, %152 : vector<8x128xf32>
    %154 = arith.maximumf %143, %153 : vector<8x128xf32>
    %cst_58 = arith.constant 0.000000e+00 : f32
    %155 = vector.broadcast %cst_58 : f32 to vector<8x128xf32>
    %156 = arith.maximumf %154, %155 : vector<8x128xf32>
    %c4_59 = arith.constant 4 : index
    %c0_60 = arith.constant 0 : index
    %c0_61 = arith.constant 0 : index
    %157 = vector.load %arg8[%c4_59, %c0_60, %c0_61] : memref<6x128x32xf32, #tpu.memory_space<vmem>>, vector<1x128x32xf32>
    %158 = vector.shape_cast %157 : vector<1x128x32xf32> to vector<128x32xf32>
    %cst_62 = arith.constant dense<0.000000e+00> : vector<8x32xf32>
    %159 = tpu.matmul %156, %158, %cst_62 {dimension_numbers = #tpu.dot_dimension_numbers<[1], [0], [0], [1], [0, 0, 1, 1], [], []>} : vector<8x128xf32>, vector<128x32xf32>, vector<8x32xf32> -> vector<8x32xf32>
    %160 = arith.addf %129, %159 : vector<8x32xf32>
    %c5 = arith.constant 5 : index
    %c0_63 = arith.constant 0 : index
    %161 = memref.load %arg6[%c5, %c0_63] : memref<6x3xf32, #tpu.memory_space<smem>>
    %c5_64 = arith.constant 5 : index
    %c1_65 = arith.constant 1 : index
    %162 = memref.load %arg6[%c5_64, %c1_65] : memref<6x3xf32, #tpu.memory_space<smem>>
    %c5_66 = arith.constant 5 : index
    %c2_67 = arith.constant 2 : index
    %163 = memref.load %arg6[%c5_66, %c2_67] : memref<6x3xf32, #tpu.memory_space<smem>>
    %c5_68 = arith.constant 5 : index
    %164 = memref.load %arg7[%c5_68] : memref<6xf32, #tpu.memory_space<smem>>
    %165 = vector.broadcast %161 : f32 to vector<8x128xf32>
    %166 = arith.mulf %165, %3 : vector<8x128xf32>
    %167 = vector.broadcast %162 : f32 to vector<8x128xf32>
    %168 = arith.mulf %167, %4 : vector<8x128xf32>
    %169 = arith.addf %166, %168 : vector<8x128xf32>
    %170 = vector.broadcast %163 : f32 to vector<8x128xf32>
    %171 = arith.mulf %170, %5 : vector<8x128xf32>
    %172 = arith.addf %169, %171 : vector<8x128xf32>
    %173 = vector.broadcast %164 : f32 to vector<8x128xf32>
    %174 = arith.addf %172, %173 : vector<8x128xf32>
    %175 = vector.broadcast %161 : f32 to vector<8x128xf32>
    %176 = arith.mulf %175, %4 : vector<8x128xf32>
    %177 = vector.broadcast %162 : f32 to vector<8x128xf32>
    %178 = arith.mulf %177, %5 : vector<8x128xf32>
    %179 = arith.addf %176, %178 : vector<8x128xf32>
    %180 = vector.broadcast %163 : f32 to vector<8x128xf32>
    %181 = arith.mulf %180, %6 : vector<8x128xf32>
    %182 = arith.addf %179, %181 : vector<8x128xf32>
    %183 = vector.broadcast %164 : f32 to vector<8x128xf32>
    %184 = arith.addf %182, %183 : vector<8x128xf32>
    %185 = arith.maximumf %174, %184 : vector<8x128xf32>
    %cst_69 = arith.constant 0.000000e+00 : f32
    %186 = vector.broadcast %cst_69 : f32 to vector<8x128xf32>
    %187 = arith.maximumf %185, %186 : vector<8x128xf32>
    %c5_70 = arith.constant 5 : index
    %c0_71 = arith.constant 0 : index
    %c0_72 = arith.constant 0 : index
    %188 = vector.load %arg8[%c5_70, %c0_71, %c0_72] : memref<6x128x32xf32, #tpu.memory_space<vmem>>, vector<1x128x32xf32>
    %189 = vector.shape_cast %188 : vector<1x128x32xf32> to vector<128x32xf32>
    %cst_73 = arith.constant dense<0.000000e+00> : vector<8x32xf32>
    %190 = tpu.matmul %187, %189, %cst_73 {dimension_numbers = #tpu.dot_dimension_numbers<[1], [0], [0], [1], [0, 0, 1, 1], [], []>} : vector<8x128xf32>, vector<128x32xf32>, vector<8x32xf32> -> vector<8x32xf32>
    %191 = arith.addf %160, %190 : vector<8x32xf32>
    %c0_74 = arith.constant 0 : index
    %c0_75 = arith.constant 0 : index
    %192 = vector.load %arg13[%c0_74, %c0_75] : memref<8x32xf32, #tpu.memory_space<vmem>>, vector<8x32xf32>
    %193 = arith.addf %192, %191 : vector<8x32xf32>
    %c0_76 = arith.constant 0 : index
    %c0_77 = arith.constant 0 : index
    %194 = vector.load %arg13[%c0_76, %c0_77] : memref<8x32xf32, #tpu.memory_space<vmem>>, vector<8x32xf32>
    tpu.vector_store %arg13[%c0_76, %c0_77], %193 {strides = array<i32>} : memref<8x32xf32, #tpu.memory_space<vmem>>, vector<8x32xf32>,
    %c1_i32 = arith.constant 1 : i32
    %195 = arith.cmpi eq, %arg1, %c1_i32 : i32
    %196 = arith.extui %195 : i1 to i32
    %c0_i32_78 = arith.constant 0 : i32
    %197 = arith.cmpi ne, %196, %c0_i32_78 : i32
    scf.if %197 {
      %c0_79 = arith.constant 0 : index
      %c0_80 = arith.constant 0 : index
      %198 = vector.load %arg13[%c0_79, %c0_80] : memref<8x32xf32, #tpu.memory_space<vmem>>, vector<8x32xf32>
      %c0_81 = arith.constant 0 : index
      %c0_82 = arith.constant 0 : index
      %199 = vector.load %arg9[%c0_81, %c0_82] : memref<1x32xf32, #tpu.memory_space<vmem>>, vector<1x32xf32>
      %200 = vector.broadcast %199 : vector<1x32xf32> to vector<8x32xf32>
      %201 = arith.addf %198, %200 : vector<8x32xf32>
      %cst_83 = arith.constant 0.000000e+00 : f32
      %202 = vector.broadcast %cst_83 : f32 to vector<8x32xf32>
      %203 = arith.maximumf %201, %202 : vector<8x32xf32>
      %c0_84 = arith.constant 0 : index
      %c0_85 = arith.constant 0 : index
      %204 = vector.load %arg10[%c0_84, %c0_85] : memref<32x128xf32, #tpu.memory_space<vmem>>, vector<32x128xf32>
      %cst_86 = arith.constant dense<0.000000e+00> : vector<8x128xf32>
      %205 = tpu.matmul %203, %204, %cst_86 {dimension_numbers = #tpu.dot_dimension_numbers<[1], [0], [0], [1], [0, 0, 1, 1], [], []>} : vector<8x32xf32>, vector<32x128xf32>, vector<8x128xf32> -> vector<8x128xf32>
      %c0_87 = arith.constant 0 : index
      %c0_88 = arith.constant 0 : index
      %206 = vector.load %arg11[%c0_87, %c0_88] : memref<1x128xf32, #tpu.memory_space<vmem>>, vector<1x128xf32>
      %207 = vector.broadcast %206 : vector<1x128xf32> to vector<8x128xf32>
      %208 = arith.addf %205, %207 : vector<8x128xf32>
      %c0_89 = arith.constant 0 : index
      %c0_90 = arith.constant 0 : index
      %209 = vector.load %arg12[%c0_89, %c0_90] : memref<8x128xf32, #tpu.memory_space<vmem>>, vector<8x128xf32>
      tpu.vector_store %arg12[%c0_89, %c0_90], %208 {strides = array<i32>} : memref<8x128xf32, #tpu.memory_space<vmem>>, vector<8x128xf32>,
    } else {
    }
    return
  }
  func.func @transform_0(%arg0: i32, %arg1: i32) -> (i32, i32) {
    %c0_i32 = arith.constant 0 : i32
    return %arg0, %arg1 : i32, i32
  }
  func.func @transform_1(%arg0: i32, %arg1: i32) -> (i32, i32) {
    %c0_i32 = arith.constant 0 : i32
    return %arg0, %arg1 : i32, i32
  }
  func.func @transform_2(%arg0: i32, %arg1: i32) -> (i32, i32) {
    %c0_i32 = arith.constant 0 : i32
    return %arg0, %arg1 : i32, i32
  }
  func.func @transform_3(%arg0: i32, %arg1: i32) -> (i32, i32) {
    %c0_i32 = arith.constant 0 : i32
    return %arg0, %arg1 : i32, i32
  }
  func.func @transform_4(%arg0: i32, %arg1: i32) -> (i32, i32) {
    %c0_i32 = arith.constant 0 : i32
    %c0_i32_0 = arith.constant 0 : i32
    %c0_i32_1 = arith.constant 0 : i32
    return %c0_i32, %c0_i32_0 : i32, i32
  }
  func.func @transform_5(%arg0: i32, %arg1: i32) -> i32 {
    %c0_i32 = arith.constant 0 : i32
    %c0_i32_0 = arith.constant 0 : i32
    return %c0_i32 : i32
  }
  func.func @transform_6(%arg0: i32, %arg1: i32) -> (i32, i32, i32) {
    %c0_i32 = arith.constant 0 : i32
    %c0_i32_0 = arith.constant 0 : i32
    %c0_i32_1 = arith.constant 0 : i32
    return %c0_i32, %arg1, %c0_i32_0 : i32, i32, i32
  }
  func.func @transform_7(%arg0: i32, %arg1: i32) -> (i32, i32) {
    %c0_i32 = arith.constant 0 : i32
    %c0_i32_0 = arith.constant 0 : i32
    %c0_i32_1 = arith.constant 0 : i32
    return %c0_i32, %c0_i32_0 : i32, i32
  }
  func.func @transform_8(%arg0: i32, %arg1: i32) -> (i32, i32) {
    %c0_i32 = arith.constant 0 : i32
    %c0_i32_0 = arith.constant 0 : i32
    %c0_i32_1 = arith.constant 0 : i32
    return %c0_i32, %c0_i32_0 : i32, i32
  }
  func.func @transform_9(%arg0: i32, %arg1: i32) -> (i32, i32) {
    %c0_i32 = arith.constant 0 : i32
    %c0_i32_0 = arith.constant 0 : i32
    %c0_i32_1 = arith.constant 0 : i32
    return %c0_i32, %c0_i32_0 : i32, i32
  }
  func.func @transform_10(%arg0: i32, %arg1: i32) -> (i32, i32) {
    %c0_i32 = arith.constant 0 : i32
    %c0_i32_0 = arith.constant 0 : i32
    return %arg0, %c0_i32 : i32, i32
  }
}

</mosaic_0001>

<llo_original>
// kernel: tpu_custom_call.1
$region0: #{tpu_custom_call.1}
  #allocation0 [shape = 'u32[]', space=smem, size = 0x4, offset = 0x4, fixed_abs, tag = 'smem constant byte address 0x4 - core index']
  #allocation1 [shape = 'u32[72,128]{1,0:T(1,128)}', space=vmem, size = 0x9000, scoped, tag = 'internal scratch']
  #allocation2 [shape = 'f32[8,32]{1,0:T(8,128)}', space=vmem, size = 0x1000, scoped, tag = 'scratch operand']
  %s0 = inlined_call_operand.vmem [shape: f32[16,256], index: 0, kind: input, shape index: {}]
  %s1 = inlined_call_operand.vmem [shape: f32[16,256], index: 1, kind: input, shape index: {}]
  %s2 = inlined_call_operand.vmem [shape: f32[16,256], index: 2, kind: input, shape index: {}]
  %s3 = inlined_call_operand.vmem [shape: f32[16,256], index: 3, kind: input, shape index: {}]
  %s4 = inlined_call_operand.vmem [shape: f32[6,3], index: 4, kind: input, shape index: {}]
  %s5 = inlined_call_operand.vmem [shape: f32[6], index: 5, kind: input, shape index: {}]
  %s6 = inlined_call_operand.vmem [shape: f32[6,256,32], index: 6, kind: input, shape index: {}]
  %s7 = inlined_call_operand.vmem [shape: f32[1,32], index: 7, kind: input, shape index: {}]
  %s8 = inlined_call_operand.vmem [shape: f32[32,128], index: 8, kind: input, shape index: {}]
  %s9 = inlined_call_operand.vmem [shape: f32[1,128], index: 9, kind: input, shape index: {}]
  %s10 = inlined_call_operand.hbm [shape: f32[16,128], index: 10, kind: output, shape index: {}]
  %s11 = sld [smem:[#allocation0]]
  $region127: #{tpu_custom_call.1} parent=0
    _
  %s13 = ssub.s32 1, %s11
  %s14 = scalar_select 0, %s13, %s11
  $region1: #{tpu_custom_call.1} parent=0
    #allocation3 [shape = 'u8[4096]{0}', space=smem, size = 0x1000, scoped, tag = 'input window, operand 4, single buffered']
    #allocation4 [shape = 's32[2]{0}', space=sflag, size = 0x8, scoped, tag = 'scoped memory for tpu_custom_call.1']
    #allocation5 [shape = 's32[2]{0}', space=sflag, size = 0x8, scoped, tag = 'scoped memory for tpu_custom_call.1']
    #allocation6 [shape = 'u8[512]{0}', space=smem, size = 0x200, scoped, tag = 'input window, operand 5, single buffered']
    #allocation7 [shape = 's32[1]{0}', space=sflag, size = 0x4, scoped, tag = 'scoped memory for tpu_custom_call.1']
    #allocation8 [shape = 'u8[786432]{0}', space=vmem, size = 0xc0000, scoped, tag = 'input window, operand 6']
    #allocation9 [shape = 'u8[8192]{0}', space=vmem, size = 0x2000, scoped, tag = 'output window, operand 0']
    %15 = vsyncpa [#allocation5], 0
    %16 = vsyncpa [#allocation7], 0
    %17 = vsyncpa [#allocation4], 0
    %s18 = scalar_lea.sflag [#allocation4], 1
    %19 = vsyncpa %s18, 0
    loop: start=0, step=1, limit=6
    $region2: #{tpu_custom_call.1} parent=1 // loop_pre_header
      _
    $region3: #{tpu_custom_call.1} parent=1 // loop_header
      %s21 = sphi 0, %s25
      %p22 = scmp.ge.s32.totalorder %s21, 6
      %s28 = sphi 0, %s40
      %s29 = sphi 0, %s36
      %s30 = sphi 0, %s28
      %s31 = sphi 0, %s29
      %s32 = sphi 0, %s30
      %s33 = sphi 0, %s31
      %s45 = sphi 0, %s47
      %s48 = sphi 0, %s45
      %s49 = sphi 0, %s48
      %s65 = sphi 0, %s49
      %s73 = sphi 0, %s75
      %s76 = sphi 0, %s73
      %s77 = sphi 0, %s76
      %s93 = sphi 0, %s77
      %s101 = sphi 0, %s103
      %s104 = sphi 0, %s101
      %s105 = sphi 0, %s104
      %s121 = sphi 0, %s105
      %s129 = sphi 0, %s131
      %s132 = sphi 0, %s129
      %s133 = sphi 0, %s132
      %s149 = sphi 0, %s133
      %s153 = sphi 0, %s153
      %s155 = sphi 0, %s153
      %s156 = sphi 0, %s155
      %s170 = sphi 0, %s156
      %s174 = sphi 0, %s174
      %s176 = sphi 0, %s174
      %s177 = sphi 0, %s176
      %s191 = sphi 0, %s177
      %s197 = sphi 0, %s199
      %s200 = sphi 0, %s197
      %s201 = sphi 0, %s200
      %s217 = sphi 0, %s201
      %s221 = sphi 0, %s221
      %s223 = sphi 0, %s221
      %s224 = sphi 0, %s223
      %s238 = sphi 0, %s224
      %s242 = sphi 0, %s242
      %s244 = sphi 0, %s242
      %s245 = sphi 0, %s244
      %s259 = sphi 0, %s245
      %s263 = sphi 0, %s263
      %s265 = sphi 0, %s263
      %s266 = sphi 0, %s265
      %s280 = sphi 0, %s266
      %s286 = sphi 0, %s288
      %s289 = sphi 0, %s286
      %s290 = sphi 0, %s289
      %s306 = sphi 0, %s290
    $region4: #{tpu_custom_call.1} parent=1 // loop_header_branch
      %24 = sbr.rel (%p22) target = $region8
    $region5: #{tpu_custom_call.1} parent=1 // loop_body
      %s26 = ssub.s32 %s21, 1
      %s27 = ssub.s32 %s21, 2
      %s34 = sadd.s32 1, %s29
      %p35 = scmp.ge.s32.totalorder %s34, 2
      %s36 = scalar_select %p35, 0, %s34
      %s37 = sadd.s32 1, %s28
      %s38 = scalar_select %p35, %s37, %s28
      %p39 = scmp.ge.s32.totalorder %s38, 2
      %s40 = scalar_select %p39, 0, %s38
      %s41 = ssub.s32 %s28, %s40
      %s42 = ssub.s32 %s29, %s36
      %s43 = sor.u32 %s41, %s42
      %p44 = scmp.eq.s32.totalorder %s43, 0
      %s46 = sadd.s32 %s45, 1
      %s47 = scalar_select %p44, %s45, %s46
      %p50 = pneg %p44
      %p51 = scmp.eq.s32.totalorder %s21, 3
      %p52 = por %p50, %p51
      %p53 = scmp.ne.s32.totalorder %s45, %s48
      %p54 = scmp.eq.s32.totalorder %s21, 0
      %p55 = por %p53, %p54
      %p56 = scmp.ne.s32.totalorder %s45, %s48
      %p57 = scmp.eq.s32.totalorder %s26, 3
      %p58 = por %p56, %p57
      %p59 = scmp.ne.s32.totalorder %s48, %s49
      %p60 = scmp.eq.s32.totalorder %s26, 0
      %p61 = por %p59, %p60
      %p62 = scmp.ne.s32.totalorder %s48, %s49
      %p63 = scmp.eq.s32.totalorder %s27, 3
      %p64 = por %p62, %p63
      %p66 = scmp.ne.s32.totalorder %s49, %s65
      %p67 = scmp.eq.s32.totalorder %s27, 0
      %p68 = por %p66, %p67
      %s69 = ssub.s32 %s28, %s40
      %s70 = ssub.s32 %s29, %s36
      %s71 = sor.u32 %s69, %s70
      %p72 = scmp.eq.s32.totalorder %s71, 0
      %s74 = sadd.s32 %s73, 1
      %s75 = scalar_select %p72, %s73, %s74
      %p78 = pneg %p72
      %p79 = scmp.eq.s32.totalorder %s21, 3
      %p80 = por %p78, %p79
      %p81 = scmp.ne.s32.totalorder %s73, %s76
      %p82 = scmp.eq.s32.totalorder %s21, 0
      %p83 = por %p81, %p82
      %p84 = scmp.ne.s32.totalorder %s73, %s76
      %p85 = scmp.eq.s32.totalorder %s26, 3
      %p86 = por %p84, %p85
      %p87 = scmp.ne.s32.totalorder %s76, %s77
      %p88 = scmp.eq.s32.totalorder %s26, 0
      %p89 = por %p87, %p88
      %p90 = scmp.ne.s32.totalorder %s76, %s77
      %p91 = scmp.eq.s32.totalorder %s27, 3
      %p92 = por %p90, %p91
      %p94 = scmp.ne.s32.totalorder %s77, %s93
      %p95 = scmp.eq.s32.totalorder %s27, 0
      %p96 = por %p94, %p95
      %s97 = ssub.s32 %s28, %s40
      %s98 = ssub.s32 %s29, %s36
      %s99 = sor.u32 %s97, %s98
      %p100 = scmp.eq.s32.totalorder %s99, 0
      %s102 = sadd.s32 %s101, 1
      %s103 = scalar_select %p100, %s101, %s102
      %p106 = pneg %p100
      %p107 = scmp.eq.s32.totalorder %s21, 3
      %p108 = por %p106, %p107
      %p109 = scmp.ne.s32.totalorder %s101, %s104
      %p110 = scmp.eq.s32.totalorder %s21, 0
      %p111 = por %p109, %p110
      %p112 = scmp.ne.s32.totalorder %s101, %s104
      %p113 = scmp.eq.s32.totalorder %s26, 3
      %p114 = por %p112, %p113
      %p115 = scmp.ne.s32.totalorder %s104, %s105
      %p116 = scmp.eq.s32.totalorder %s26, 0
      %p117 = por %p115, %p116
      %p118 = scmp.ne.s32.totalorder %s104, %s105
      %p119 = scmp.eq.s32.totalorder %s27, 3
      %p120 = por %p118, %p119
      %p122 = scmp.ne.s32.totalorder %s105, %s121
      %p123 = scmp.eq.s32.totalorder %s27, 0
      %p124 = por %p122, %p123
      %s125 = ssub.s32 %s28, %s40
      %s126 = ssub.s32 %s29, %s36
      %s127 = sor.u32 %s125, %s126
      %p128 = scmp.eq.s32.totalorder %s127, 0
      %s130 = sadd.s32 %s129, 1
      %s131 = scalar_select %p128, %s129, %s130
      %p134 = pneg %p128
      %p135 = scmp.eq.s32.totalorder %s21, 3
      %p136 = por %p134, %p135
      %p137 = scmp.ne.s32.totalorder %s129, %s132
      %p138 = scmp.eq.s32.totalorder %s21, 0
      %p139 = por %p137, %p138
      %p140 = scmp.ne.s32.totalorder %s129, %s132
      %p141 = scmp.eq.s32.totalorder %s26, 3
      %p142 = por %p140, %p141
      %p143 = scmp.ne.s32.totalorder %s132, %s133
      %p144 = scmp.eq.s32.totalorder %s26, 0
      %p145 = por %p143, %p144
      %p146 = scmp.ne.s32.totalorder %s132, %s133
      %p147 = scmp.eq.s32.totalorder %s27, 3
      %p148 = por %p146, %p147
      %p150 = scmp.ne.s32.totalorder %s133, %s149
      %p151 = scmp.eq.s32.totalorder %s27, 0
      %p152 = por %p150, %p151
      %s154 = sadd.s32 %s153, 1
      %p157 = scmp.eq.s32.totalorder %s21, 3
      %p158 = scmp.ne.s32.totalorder %s153, %s155
      %p159 = scmp.eq.s32.totalorder %s21, 0
      %p160 = por %p158, %p159
      %p161 = scmp.ne.s32.totalorder %s153, %s155
      %p162 = scmp.eq.s32.totalorder %s26, 3
      %p163 = por %p161, %p162
      %p164 = scmp.ne.s32.totalorder %s155, %s156
      %p165 = scmp.eq.s32.totalorder %s26, 0
      %p166 = por %p164, %p165
      %p167 = scmp.ne.s32.totalorder %s155, %s156
      %p168 = scmp.eq.s32.totalorder %s27, 3
      %p169 = por %p167, %p168
      %p171 = scmp.ne.s32.totalorder %s156, %s170
      %p172 = scmp.eq.s32.totalorder %s27, 0
      %p173 = por %p171, %p172
      %s175 = sadd.s32 %s174, 1
      %p178 = scmp.eq.s32.totalorder %s21, 3
      %p179 = scmp.ne.s32.totalorder %s174, %s176
      %p180 = scmp.eq.s32.totalorder %s21, 0
      %p181 = por %p179, %p180
      %p182 = scmp.ne.s32.totalorder %s174, %s176
      %p183 = scmp.eq.s32.totalorder %s26, 3
      %p184 = por %p182, %p183
      %p185 = scmp.ne.s32.totalorder %s176, %s177
      %p186 = scmp.eq.s32.totalorder %s26, 0
      %p187 = por %p185, %p186
      %p188 = scmp.ne.s32.totalorder %s176, %s177
      %p189 = scmp.eq.s32.totalorder %s27, 3
      %p190 = por %p188, %p189
      %p192 = scmp.ne.s32.totalorder %s177, %s191
      %p193 = scmp.eq.s32.totalorder %s27, 0
      %p194 = por %p192, %p193
      %s195 = ssub.s32 %s29, %s36
      %p196 = scmp.eq.s32.totalorder %s195, 0
      %s198 = sadd.s32 %s197, 1
      %s199 = scalar_select %p196, %s197, %s198
      %p202 = pneg %p196
      %p203 = scmp.eq.s32.totalorder %s21, 3
      %p204 = por %p202, %p203
      %p205 = scmp.ne.s32.totalorder %s197, %s200
      %p206 = scmp.eq.s32.totalorder %s21, 0
      %p207 = por %p205, %p206
      %p208 = scmp.ne.s32.totalorder %s197, %s200
      %p209 = scmp.eq.s32.totalorder %s26, 3
      %p210 = por %p208, %p209
      %p211 = scmp.ne.s32.totalorder %s200, %s201
      %p212 = scmp.eq.s32.totalorder %s26, 0
      %p213 = por %p211, %p212
      %p214 = scmp.ne.s32.totalorder %s200, %s201
      %p215 = scmp.eq.s32.totalorder %s27, 3
      %p216 = por %p214, %p215
      %p218 = scmp.ne.s32.totalorder %s201, %s217
      %p219 = scmp.eq.s32.totalorder %s27, 0
      %p220 = por %p218, %p219
      %s222 = sadd.s32 %s221, 1
      %p225 = scmp.eq.s32.totalorder %s21, 3
      %p226 = scmp.ne.s32.totalorder %s221, %s223
      %p227 = scmp.eq.s32.totalorder %s21, 0
      %p228 = por %p226, %p227
      %p229 = scmp.ne.s32.totalorder %s221, %s223
      %p230 = scmp.eq.s32.totalorder %s26, 3
      %p231 = por %p229, %p230
      %p232 = scmp.ne.s32.totalorder %s223, %s224
      %p233 = scmp.eq.s32.totalorder %s26, 0
      %p234 = por %p232, %p233
      %p235 = scmp.ne.s32.totalorder %s223, %s224
      %p236 = scmp.eq.s32.totalorder %s27, 3
      %p237 = por %p235, %p236
      %p239 = scmp.ne.s32.totalorder %s224, %s238
      %p240 = scmp.eq.s32.totalorder %s27, 0
      %p241 = por %p239, %p240
      %s243 = sadd.s32 %s242, 1
      %p246 = scmp.eq.s32.totalorder %s21, 3
      %p247 = scmp.ne.s32.totalorder %s242, %s244
      %p248 = scmp.eq.s32.totalorder %s21, 0
      %p249 = por %p247, %p248
      %p250 = scmp.ne.s32.totalorder %s242, %s244
      %p251 = scmp.eq.s32.totalorder %s26, 3
      %p252 = por %p250, %p251
      %p253 = scmp.ne.s32.totalorder %s244, %s245
      %p254 = scmp.eq.s32.totalorder %s26, 0
      %p255 = por %p253, %p254
      %p256 = scmp.ne.s32.totalorder %s244, %s245
      %p257 = scmp.eq.s32.totalorder %s27, 3
      %p258 = por %p256, %p257
      %p260 = scmp.ne.s32.totalorder %s245, %s259
      %p261 = scmp.eq.s32.totalorder %s27, 0
      %p262 = por %p260, %p261
      %s264 = sadd.s32 %s263, 1
      %p267 = scmp.eq.s32.totalorder %s21, 3
      %p268 = scmp.ne.s32.totalorder %s263, %s265
      %p269 = scmp.eq.s32.totalorder %s21, 0
      %p270 = por %p268, %p269
      %p271 = scmp.ne.s32.totalorder %s263, %s265
      %p272 = scmp.eq.s32.totalorder %s26, 3
      %p273 = por %p271, %p272
      %p274 = scmp.ne.s32.totalorder %s265, %s266
      %p275 = scmp.eq.s32.totalorder %s26, 0
      %p276 = por %p274, %p275
      %p277 = scmp.ne.s32.totalorder %s265, %s266
      %p278 = scmp.eq.s32.totalorder %s27, 3
      %p279 = por %p277, %p278
      %p281 = scmp.ne.s32.totalorder %s266, %s280
      %p282 = scmp.eq.s32.totalorder %s27, 0
      %p283 = por %p281, %p282
      %s284 = ssub.s32 %s28, %s40
      %p285 = scmp.eq.s32.totalorder %s284, 0
      %s287 = sadd.s32 %s286, 1
      %s288 = scalar_select %p285, %s286, %s287
      %p291 = pneg %p285
      %p292 = scmp.eq.s32.totalorder %s21, 3
      %p293 = por %p291, %p292
      %p294 = scmp.ne.s32.totalorder %s286, %s289
      %p295 = scmp.eq.s32.totalorder %s21, 0
      %p296 = por %p294, %p295
      %p297 = scmp.ne.s32.totalorder %s286, %s289
      %p298 = scmp.eq.s32.totalorder %s26, 3
      %p299 = por %p297, %p298
      %p300 = scmp.ne.s32.totalorder %s289, %s290
      %p301 = scmp.eq.s32.totalorder %s26, 0
      %p302 = por %p300, %p301
      %p303 = scmp.ne.s32.totalorder %s289, %s290
      %p304 = scmp.eq.s32.totalorder %s27, 3
      %p305 = por %p303, %p304
      %p307 = scmp.ne.s32.totalorder %s290, %s306
      %p308 = scmp.eq.s32.totalorder %s27, 0
      %p309 = por %p307, %p308
      %p310 = scmp.le.s32.totalorder 1, %s21
      %p311 = scmp.lt.s32.totalorder %s21, 5
      %p312 = pnand %p310, %p311
      %p313 = pneg %p312
      // Predicated region
      $region9: #{tpu_custom_call.1} parent=5 // pred_check
        _
      $region10: #{tpu_custom_call.1} parent=5 // pred_check_branch
        %315 = sbr.rel (%p312) target = $region12
      $region11: #{tpu_custom_call.1} parent=5 // pred_region
        %s316 = ssub.s32 %s21, 1
        // Predicated region
        $region13: #{tpu_custom_call.1} parent=11 // pred_check
          %p317 = pneg %p166
        $region14: #{tpu_custom_call.1} parent=11 // pred_check_branch
          %319 = sbr.rel (%p317) target = $region16
        $region15: #{tpu_custom_call.1} parent=11 // pred_region
          %321 = vsyncadd [#allocation5], 0
          %s323 = sshll.u32 %s4, 4
          %s324 = int_to_ptr.vmem [resolvable:$true] %s323
          %326 = dma.vmem_to_smem %s324, 128, [#allocation3], [#allocation5]
        $region16: #{tpu_custom_call.1} parent=11 // pred_fallthru
          _
        // Predicated region
        $region17: #{tpu_custom_call.1} parent=11 // pred_check
          %p327 = pneg %p187
        $region18: #{tpu_custom_call.1} parent=11 // pred_check_branch
          %329 = sbr.rel (%p327) target = $region20
        $region19: #{tpu_custom_call.1} parent=11 // pred_region
          %331 = vsyncadd [#allocation7], 0
          %s333 = sshll.u32 %s5, 4
          %s334 = int_to_ptr.vmem [resolvable:$true] %s333
          %336 = dma.vmem_to_smem %s334, 16, [#allocation6], [#allocation7]
        $region20: #{tpu_custom_call.1} parent=11 // pred_fallthru
          _
        // Predicated region
        $region21: #{tpu_custom_call.1} parent=11 // pred_check
          %p337 = pneg %p234
        $region22: #{tpu_custom_call.1} parent=11 // pred_check_branch
          %339 = sbr.rel (%p337) target = $region24
        $region23: #{tpu_custom_call.1} parent=11 // pred_region
          _
        $region24: #{tpu_custom_call.1} parent=11 // pred_fallthru
          _
        // Predicated region
        $region25: #{tpu_custom_call.1} parent=11 // pred_check
          %p340 = pneg %p255
        $region26: #{tpu_custom_call.1} parent=11 // pred_check_branch
          %342 = sbr.rel (%p340) target = $region28
        $region27: #{tpu_custom_call.1} parent=11 // pred_region
          _
        $region28: #{tpu_custom_call.1} parent=11 // pred_fallthru
          _
        // Predicated region
        $region29: #{tpu_custom_call.1} parent=11 // pred_check
          %p343 = pneg %p276
        $region30: #{tpu_custom_call.1} parent=11 // pred_check_branch
          %345 = sbr.rel (%p343) target = $region32
        $region31: #{tpu_custom_call.1} parent=11 // pred_region
          _
        $region32: #{tpu_custom_call.1} parent=11 // pred_fallthru
          _
      $region12: #{tpu_custom_call.1} parent=5 // pred_fallthru
        _
      %p346 = scmp.lt.s32.totalorder %s21, 4
      // Predicated region
      $region33: #{tpu_custom_call.1} parent=5 // pred_check
        %p347 = pneg %p346
      $region34: #{tpu_custom_call.1} parent=5 // pred_check_branch
        %349 = sbr.rel (%p347) target = $region36
      $region35: #{tpu_custom_call.1} parent=5 // pred_region
        // Predicated region
        $region37: #{tpu_custom_call.1} parent=35 // pred_check
          %p350 = pneg %p55
        $region38: #{tpu_custom_call.1} parent=35 // pred_check_branch
          %352 = sbr.rel (%p350) target = $region40
        $region39: #{tpu_custom_call.1} parent=35 // pred_region
          %p353 = scmp.lt.s32.totalorder %s28, 1
          %s354 = scalar_select %p353, %s28, 1
          %p355 = scmp.lt.s32.totalorder %s29, 1
          %s356 = scalar_select %p355, %s29, 1
          %s357 = smul.addr %s354, 2
          %s358 = sadd.s32 %s356, %s357
          %s359 = smul.addr %s358, 8
          %s360 = scalar_lea.vmem %s0, %s359
        $region40: #{tpu_custom_call.1} parent=35 // pred_fallthru
          _
        // Predicated region
        $region41: #{tpu_custom_call.1} parent=35 // pred_check
          %p361 = pneg %p83
        $region42: #{tpu_custom_call.1} parent=35 // pred_check_branch
          %363 = sbr.rel (%p361) target = $region44
        $region43: #{tpu_custom_call.1} parent=35 // pred_region
          %p364 = scmp.lt.s32.totalorder %s28, 1
          %s365 = scalar_select %p364, %s28, 1
          %p366 = scmp.lt.s32.totalorder %s29, 1
          %s367 = scalar_select %p366, %s29, 1
          %s368 = smul.addr %s365, 2
          %s369 = sadd.s32 %s367, %s368
          %s370 = smul.addr %s369, 8
          %s371 = scalar_lea.vmem %s1, %s370
        $region44: #{tpu_custom_call.1} parent=35 // pred_fallthru
          _
        // Predicated region
        $region45: #{tpu_custom_call.1} parent=35 // pred_check
          %p372 = pneg %p111
        $region46: #{tpu_custom_call.1} parent=35 // pred_check_branch
          %374 = sbr.rel (%p372) target = $region48
        $region47: #{tpu_custom_call.1} parent=35 // pred_region
          %p375 = scmp.lt.s32.totalorder %s28, 1
          %s376 = scalar_select %p375, %s28, 1
          %p377 = scmp.lt.s32.totalorder %s29, 1
          %s378 = scalar_select %p377, %s29, 1
          %s379 = smul.addr %s376, 2
          %s380 = sadd.s32 %s378, %s379
          %s381 = smul.addr %s380, 8
          %s382 = scalar_lea.vmem %s2, %s381
        $region48: #{tpu_custom_call.1} parent=35 // pred_fallthru
          _
        // Predicated region
        $region49: #{tpu_custom_call.1} parent=35 // pred_check
          %p383 = pneg %p139
        $region50: #{tpu_custom_call.1} parent=35 // pred_check_branch
          %385 = sbr.rel (%p383) target = $region52
        $region51: #{tpu_custom_call.1} parent=35 // pred_region
          %p386 = scmp.lt.s32.totalorder %s28, 1
          %s387 = scalar_select %p386, %s28, 1
          %p388 = scmp.lt.s32.totalorder %s29, 1
          %s389 = scalar_select %p388, %s29, 1
          %s390 = smul.addr %s387, 2
          %s391 = sadd.s32 %s389, %s390
          %s392 = smul.addr %s391, 8
          %s393 = scalar_lea.vmem %s3, %s392
        $region52: #{tpu_custom_call.1} parent=35 // pred_fallthru
          _
        // Predicated region
        $region53: #{tpu_custom_call.1} parent=35 // pred_check
          %p394 = pneg %p207
        $region54: #{tpu_custom_call.1} parent=35 // pred_check_branch
          %396 = sbr.rel (%p394) target = $region56
        $region55: #{tpu_custom_call.1} parent=35 // pred_region
          %s397 = sand.u32 %s197, 1
          %s398 = sand.u32 %s197, 1
          %s399 = smul.addr %s398, 768
          %s400 = scalar_lea.vmem [#allocation8], %s399
          %s401 = smul.u32 16, %s29
          %s402 = smul.addr %s401, 8
          %s403 = scalar_lea.vmem %s6, %s402
          // Predicated region
          $region57: #{tpu_custom_call.1} parent=55 // pred_check
            _
          $region58: #{tpu_custom_call.1} parent=55 // pred_check_branch
            %405 = sbr.rel (0) target = $region60
          $region59: #{tpu_custom_call.1} parent=55 // pred_region
            // Predicated region
            $region61: #{tpu_custom_call.1} parent=59 // pred_check
              _
            $region62: #{tpu_custom_call.1} parent=59 // pred_check_branch
              %407 = sbr.rel (0) target = $region64
            $region63: #{tpu_custom_call.1} parent=59 // pred_region
              // Predicated region
              $region76: #{tpu_custom_call.1} parent=63 // pred_check
                _
              $region77: #{tpu_custom_call.1} parent=63 // pred_check_branch
                %613 = sbr.rel (0) target = $region79
              $region78: #{tpu_custom_call.1} parent=63 // pred_region
                loop: start=0, step=1, limit=1
                $region80: #{tpu_custom_call.1} parent=78 // loop_pre_header
                  _
                $region81: #{tpu_custom_call.1} parent=78 // loop_header
                  %s615 = sphi 0, %s619
                  %p616 = scmp.ge.s32.totalorder %s615, 1
                  %s620 = sphi %s403, %s403
                  %s621 = sphi %s400, %s400
                $region82: #{tpu_custom_call.1} parent=78 // loop_header_branch
                  %618 = sbr.rel (%p616) target = $region86
                $region83: #{tpu_custom_call.1} parent=78 // loop_body
                  %v622 = vld [vmem:[%s620] sm:$0xff]
                  %623 = vst [vmem:[%s621] sm:$0xff] %v622
                  %v624 = vld [vmem:[%s620 + $0x8] sm:$0xff]
                  %625 = vst [vmem:[%s621 + $0x8] sm:$0xff] %v624
                  %v626 = vld [vmem:[%s620 + $0x10] sm:$0xff]
                  %627 = vst [vmem:[%s621 + $0x10] sm:$0xff] %v626
                  %v628 = vld [vmem:[%s620 + $0x18] sm:$0xff]
                  %629 = vst [vmem:[%s621 + $0x18] sm:$0xff] %v628
                  %v630 = vld [vmem:[%s620 + $0x20] sm:$0xff]
                  %631 = vst [vmem:[%s621 + $0x20] sm:$0xff] %v630
                  %v632 = vld [vmem:[%s620 + $0x28] sm:$0xff]
                  %633 = vst [vmem:[%s621 + $0x28] sm:$0xff] %v632
                  %v634 = vld [vmem:[%s620 + $0x30] sm:$0xff]
                  %635 = vst [vmem:[%s621 + $0x30] sm:$0xff] %v634
                  %v636 = vld [vmem:[%s620 + $0x38] sm:$0xff]
                  %637 = vst [vmem:[%s621 + $0x38] sm:$0xff] %v636
                  %v638 = vld [vmem:[%s620 + $0x40] sm:$0xff]
                  %639 = vst [vmem:[%s621 + $0x40] sm:$0xff] %v638
                  %v640 = vld [vmem:[%s620 + $0x48] sm:$0xff]
                  %641 = vst [vmem:[%s621 + $0x48] sm:$0xff] %v640
                  %v642 = vld [vmem:[%s620 + $0x50] sm:$0xff]
                  %643 = vst [vmem:[%s621 + $0x50] sm:$0xff] %v642
                  %v644 = vld [vmem:[%s620 + $0x58] sm:$0xff]
                  %645 = vst [vmem:[%s621 + $0x58] sm:$0xff] %v644
                  %v646 = vld [vmem:[%s620 + $0x60] sm:$0xff]
                  %647 = vst [vmem:[%s621 + $0x60] sm:$0xff] %v646
                  %v648 = vld [vmem:[%s620 + $0x68] sm:$0xff]
                  %649 = vst [vmem:[%s621 + $0x68] sm:$0xff] %v648
                  %v650 = vld [vmem:[%s620 + $0x70] sm:$0xff]
                  %651 = vst [vmem:[%s621 + $0x70] sm:$0xff] %v650
                  %v652 = vld [vmem:[%s620 + $0x78] sm:$0xff]
                  %653 = vst [vmem:[%s621 + $0x78] sm:$0xff] %v652
                  %v654 = vld [vmem:[%s620 + $0x100] sm:$0xff]
                  %655 = vst [vmem:[%s621 + $0x80] sm:$0xff] %v654
                  %v656 = vld [vmem:[%s620 + $0x108] sm:$0xff]
                  %657 = vst [vmem:[%s621 + $0x88] sm:$0xff] %v656
                  %v658 = vld [vmem:[%s620 + $0x110] sm:$0xff]
                  %659 = vst [vmem:[%s621 + $0x90] sm:$0xff] %v658
                  %v660 = vld [vmem:[%s620 + $0x118] sm:$0xff]
                  %661 = vst [vmem:[%s621 + $0x98] sm:$0xff] %v660
                  %v662 = vld [vmem:[%s620 + $0x120] sm:$0xff]
                  %663 = vst [vmem:[%s621 + $0xa0] sm:$0xff] %v662
                  %v664 = vld [vmem:[%s620 + $0x128] sm:$0xff]
                  %665 = vst [vmem:[%s621 + $0xa8] sm:$0xff] %v664
                  %v666 = vld [vmem:[%s620 + $0x130] sm:$0xff]
                  %667 = vst [vmem:[%s621 + $0xb0] sm:$0xff] %v666
                  %v668 = vld [vmem:[%s620 + $0x138] sm:$0xff]
                  %669 = vst [vmem:[%s621 + $0xb8] sm:$0xff] %v668
                  %v670 = vld [vmem:[%s620 + $0x140] sm:$0xff]
                  %671 = vst [vmem:[%s621 + $0xc0] sm:$0xff] %v670
                  %v672 = vld [vmem:[%s620 + $0x148] sm:$0xff]
                  %673 = vst [vmem:[%s621 + $0xc8] sm:$0xff] %v672
                  %v674 = vld [vmem:[%s620 + $0x150] sm:$0xff]
                  %675 = vst [vmem:[%s621 + $0xd0] sm:$0xff] %v674
                  %v676 = vld [vmem:[%s620 + $0x158] sm:$0xff]
                  %677 = vst [vmem:[%s621 + $0xd8] sm:$0xff] %v676
                  %v678 = vld [vmem:[%s620 + $0x160] sm:$0xff]
                  %679 = vst [vmem:[%s621 + $0xe0] sm:$0xff] %v678
                  %v680 = vld [vmem:[%s620 + $0x168] sm:$0xff]
                  %681 = vst [vmem:[%s621 + $0xe8] sm:$0xff] %v680
                  %v682 = vld [vmem:[%s620 + $0x170] sm:$0xff]
                  %683 = vst [vmem:[%s621 + $0xf0] sm:$0xff] %v682
                  %v684 = vld [vmem:[%s620 + $0x178] sm:$0xff]
                  %685 = vst [vmem:[%s621 + $0xf8] sm:$0xff] %v684
                  %v686 = vld [vmem:[%s620 + $0x200] sm:$0xff]
                  %687 = vst [vmem:[%s621 + $0x100] sm:$0xff] %v686
                  %v688 = vld [vmem:[%s620 + $0x208] sm:$0xff]
                  %689 = vst [vmem:[%s621 + $0x108] sm:$0xff] %v688
                  %v690 = vld [vmem:[%s620 + $0x210] sm:$0xff]
                  %691 = vst [vmem:[%s621 + $0x110] sm:$0xff] %v690
                  %v692 = vld [vmem:[%s620 + $0x218] sm:$0xff]
                  %693 = vst [vmem:[%s621 + $0x118] sm:$0xff] %v692
                  %v694 = vld [vmem:[%s620 + $0x220] sm:$0xff]
                  %695 = vst [vmem:[%s621 + $0x120] sm:$0xff] %v694
                  %v696 = vld [vmem:[%s620 + $0x228] sm:$0xff]
                  %697 = vst [vmem:[%s621 + $0x128] sm:$0xff] %v696
                  %v698 = vld [vmem:[%s620 + $0x230] sm:$0xff]
                  %699 = vst [vmem:[%s621 + $0x130] sm:$0xff] %v698
                  %v700 = vld [vmem:[%s620 + $0x238] sm:$0xff]
                  %701 = vst [vmem:[%s621 + $0x138] sm:$0xff] %v700
                  %v702 = vld [vmem:[%s620 + $0x240] sm:$0xff]
                  %703 = vst [vmem:[%s621 + $0x140] sm:$0xff] %v702
                  %v704 = vld [vmem:[%s620 + $0x248] sm:$0xff]
                  %705 = vst [vmem:[%s621 + $0x148] sm:$0xff] %v704
                  %v706 = vld [vmem:[%s620 + $0x250] sm:$0xff]
                  %707 = vst [vmem:[%s621 + $0x150] sm:$0xff] %v706
                  %v708 = vld [vmem:[%s620 + $0x258] sm:$0xff]
                  %709 = vst [vmem:[%s621 + $0x158] sm:$0xff] %v708
                  %v710 = vld [vmem:[%s620 + $0x260] sm:$0xff]
                  %711 = vst [vmem:[%s621 + $0x160] sm:$0xff] %v710
                  %v712 = vld [vmem:[%s620 + $0x268] sm:$0xff]
                  %713 = vst [vmem:[%s621 + $0x168] sm:$0xff] %v712
                  %v714 = vld [vmem:[%s620 + $0x270] sm:$0xff]
                  %715 = vst [vmem:[%s621 + $0x170] sm:$0xff] %v714
                  %v716 = vld [vmem:[%s620 + $0x278] sm:$0xff]
                  %717 = vst [vmem:[%s621 + $0x178] sm:$0xff] %v716
                  %v718 = vld [vmem:[%s620 + $0x300] sm:$0xff]
                  %719 = vst [vmem:[%s621 + $0x180] sm:$0xff] %v718
                  %v720 = vld [vmem:[%s620 + $0x308] sm:$0xff]
                  %721 = vst [vmem:[%s621 + $0x188] sm:$0xff] %v720
                  %v722 = vld [vmem:[%s620 + $0x310] sm:$0xff]
                  %723 = vst [vmem:[%s621 + $0x190] sm:$0xff] %v722
                  %v724 = vld [vmem:[%s620 + $0x318] sm:$0xff]
                  %725 = vst [vmem:[%s621 + $0x198] sm:$0xff] %v724
                  %v726 = vld [vmem:[%s620 + $0x320] sm:$0xff]
                  %727 = vst [vmem:[%s621 + $0x1a0] sm:$0xff] %v726
                  %v728 = vld [vmem:[%s620 + $0x328] sm:$0xff]
                  %729 = vst [vmem:[%s621 + $0x1a8] sm:$0xff] %v728
                  %v730 = vld [vmem:[%s620 + $0x330] sm:$0xff]
                  %731 = vst [vmem:[%s621 + $0x1b0] sm:$0xff] %v730
                  %v732 = vld [vmem:[%s620 + $0x338] sm:$0xff]
                  %733 = vst [vmem:[%s621 + $0x1b8] sm:$0xff] %v732
                  %v734 = vld [vmem:[%s620 + $0x340] sm:$0xff]
                  %735 = vst [vmem:[%s621 + $0x1c0] sm:$0xff] %v734
                  %v736 = vld [vmem:[%s620 + $0x348] sm:$0xff]
                  %737 = vst [vmem:[%s621 + $0x1c8] sm:$0xff] %v736
                  %v738 = vld [vmem:[%s620 + $0x350] sm:$0xff]
                  %739 = vst [vmem:[%s621 + $0x1d0] sm:$0xff] %v738
                  %v740 = vld [vmem:[%s620 + $0x358] sm:$0xff]
                  %741 = vst [vmem:[%s621 + $0x1d8] sm:$0xff] %v740
                  %v742 = vld [vmem:[%s620 + $0x360] sm:$0xff]
                  %743 = vst [vmem:[%s621 + $0x1e0] sm:$0xff] %v742
                  %v744 = vld [vmem:[%s620 + $0x368] sm:$0xff]
                  %745 = vst [vmem:[%s621 + $0x1e8] sm:$0xff] %v744
                  %v746 = vld [vmem:[%s620 + $0x370] sm:$0xff]
                  %747 = vst [vmem:[%s621 + $0x1f0] sm:$0xff] %v746
                  %v748 = vld [vmem:[%s620 + $0x378] sm:$0xff]
                  %749 = vst [vmem:[%s621 + $0x1f8] sm:$0xff] %v748
                  %v750 = vld [vmem:[%s620 + $0x400] sm:$0xff]
                  %751 = vst [vmem:[%s621 + $0x200] sm:$0xff] %v750
                  %v752 = vld [vmem:[%s620 + $0x408] sm:$0xff]
                  %753 = vst [vmem:[%s621 + $0x208] sm:$0xff] %v752
                  %v754 = vld [vmem:[%s620 + $0x410] sm:$0xff]
                  %755 = vst [vmem:[%s621 + $0x210] sm:$0xff] %v754
                  %v756 = vld [vmem:[%s620 + $0x418] sm:$0xff]
                  %757 = vst [vmem:[%s621 + $0x218] sm:$0xff] %v756
                  %v758 = vld [vmem:[%s620 + $0x420] sm:$0xff]
                  %759 = vst [vmem:[%s621 + $0x220] sm:$0xff] %v758
                  %v760 = vld [vmem:[%s620 + $0x428] sm:$0xff]
                  %761 = vst [vmem:[%s621 + $0x228] sm:$0xff] %v760
                  %v762 = vld [vmem:[%s620 + $0x430] sm:$0xff]
                  %763 = vst [vmem:[%s621 + $0x230] sm:$0xff] %v762
                  %v764 = vld [vmem:[%s620 + $0x438] sm:$0xff]
                  %765 = vst [vmem:[%s621 + $0x238] sm:$0xff] %v764
                  %v766 = vld [vmem:[%s620 + $0x440] sm:$0xff]
                  %767 = vst [vmem:[%s621 + $0x240] sm:$0xff] %v766
                  %v768 = vld [vmem:[%s620 + $0x448] sm:$0xff]
                  %769 = vst [vmem:[%s621 + $0x248] sm:$0xff] %v768
                  %v770 = vld [vmem:[%s620 + $0x450] sm:$0xff]
                  %771 = vst [vmem:[%s621 + $0x250] sm:$0xff] %v770
                  %v772 = vld [vmem:[%s620 + $0x458] sm:$0xff]
                  %773 = vst [vmem:[%s621 + $0x258] sm:$0xff] %v772
                  %v774 = vld [vmem:[%s620 + $0x460] sm:$0xff]
                  %775 = vst [vmem:[%s621 + $0x260] sm:$0xff] %v774
                  %v776 = vld [vmem:[%s620 + $0x468] sm:$0xff]
                  %777 = vst [vmem:[%s621 + $0x268] sm:$0xff] %v776
                  %v778 = vld [vmem:[%s620 + $0x470] sm:$0xff]
                  %779 = vst [vmem:[%s621 + $0x270] sm:$0xff] %v778
                  %v780 = vld [vmem:[%s620 + $0x478] sm:$0xff]
                  %781 = vst [vmem:[%s621 + $0x278] sm:$0xff] %v780
                  %v782 = vld [vmem:[%s620 + $0x500] sm:$0xff]
                  %783 = vst [vmem:[%s621 + $0x280] sm:$0xff] %v782
                  %v784 = vld [vmem:[%s620 + $0x508] sm:$0xff]
                  %785 = vst [vmem:[%s621 + $0x288] sm:$0xff] %v784
                  %v786 = vld [vmem:[%s620 + $0x510] sm:$0xff]
                  %787 = vst [vmem:[%s621 + $0x290] sm:$0xff] %v786
                  %v788 = vld [vmem:[%s620 + $0x518] sm:$0xff]
                  %789 = vst [vmem:[%s621 + $0x298] sm:$0xff] %v788
                  %v790 = vld [vmem:[%s620 + $0x520] sm:$0xff]
                  %791 = vst [vmem:[%s621 + $0x2a0] sm:$0xff] %v790
                  %v792 = vld [vmem:[%s620 + $0x528] sm:$0xff]
                  %793 = vst [vmem:[%s621 + $0x2a8] sm:$0xff] %v792
                  %v794 = vld [vmem:[%s620 + $0x530] sm:$0xff]
                  %795 = vst [vmem:[%s621 + $0x2b0] sm:$0xff] %v794
                  %v796 = vld [vmem:[%s620 + $0x538] sm:$0xff]
                  %797 = vst [vmem:[%s621 + $0x2b8] sm:$0xff] %v796
                  %v798 = vld [vmem:[%s620 + $0x540] sm:$0xff]
                  %799 = vst [vmem:[%s621 + $0x2c0] sm:$0xff] %v798
                  %v800 = vld [vmem:[%s620 + $0x548] sm:$0xff]
                  %801 = vst [vmem:[%s621 + $0x2c8] sm:$0xff] %v800
                  %v802 = vld [vmem:[%s620 + $0x550] sm:$0xff]
                  %803 = vst [vmem:[%s621 + $0x2d0] sm:$0xff] %v802
                  %v804 = vld [vmem:[%s620 + $0x558] sm:$0xff]
                  %805 = vst [vmem:[%s621 + $0x2d8] sm:$0xff] %v804
                  %v806 = vld [vmem:[%s620 + $0x560] sm:$0xff]
                  %807 = vst [vmem:[%s621 + $0x2e0] sm:$0xff] %v806
                  %v808 = vld [vmem:[%s620 + $0x568] sm:$0xff]
                  %809 = vst [vmem:[%s621 + $0x2e8] sm:$0xff] %v808
                  %v810 = vld [vmem:[%s620 + $0x570] sm:$0xff]
                  %811 = vst [vmem:[%s621 + $0x2f0] sm:$0xff] %v810
                  %v812 = vld [vmem:[%s620 + $0x578] sm:$0xff]
                  %813 = vst [vmem:[%s621 + $0x2f8] sm:$0xff] %v812
                $region84: #{tpu_custom_call.1} parent=78 // loop_footer
                  %s619 = sadd.s32 1, %s615
                $region85: #{tpu_custom_call.1} parent=78 // loop_footer_branch
                  %614 = sbr.rel target = $region81
                $region86: #{tpu_custom_call.1} parent=78 // loop_exit
                  _
              $region79: #{tpu_custom_call.1} parent=63 // pred_fallthru
                _
              // Predicated region
              $region87: #{tpu_custom_call.1} parent=63 // pred_check
                _
              $region88: #{tpu_custom_call.1} parent=63 // pred_check_branch
                %815 = sbr.rel target = $region90
              $region89: #{tpu_custom_call.1} parent=63 // pred_region
                _
              $region90: #{tpu_custom_call.1} parent=63 // pred_fallthru
                _
            $region64: #{tpu_custom_call.1} parent=59 // pred_fallthru
              _
            // Predicated region
            $region65: #{tpu_custom_call.1} parent=59 // pred_check
              _
            $region66: #{tpu_custom_call.1} parent=59 // pred_check_branch
              %409 = sbr.rel target = $region68
            $region67: #{tpu_custom_call.1} parent=59 // pred_region
              %s411 = ssub.s32 256, 1
              loop: start=0, step=1, limit=1
              $region69: #{tpu_custom_call.1} parent=67 // loop_pre_header
                _
              $region70: #{tpu_custom_call.1} parent=67 // loop_header
                %s413 = sphi 0, %s417
                %p414 = scmp.ge.s32.totalorder %s413, 1
                %s418 = sphi %s403, %s403
                %s419 = sphi %s400, %s400
              $region71: #{tpu_custom_call.1} parent=67 // loop_header_branch
                %416 = sbr.rel (%p414) target = $region75
              $region72: #{tpu_custom_call.1} parent=67 // loop_body
                %v420 = vld [vmem:[%s418] sm:%s411]
                %421 = vst [vmem:[%s419] sm:%s411] %v420
                %v422 = vld [vmem:[%s418 + $0x8] sm:%s411]
                %423 = vst [vmem:[%s419 + $0x8] sm:%s411] %v422
                %v424 = vld [vmem:[%s418 + $0x10] sm:%s411]
                %425 = vst [vmem:[%s419 + $0x10] sm:%s411] %v424
                %v426 = vld [vmem:[%s418 + $0x18] sm:%s411]
                %427 = vst [vmem:[%s419 + $0x18] sm:%s411] %v426
                %v428 = vld [vmem:[%s418 + $0x20] sm:%s411]
                %429 = vst [vmem:[%s419 + $0x20] sm:%s411] %v428
                %v430 = vld [vmem:[%s418 + $0x28] sm:%s411]
                %431 = vst [vmem:[%s419 + $0x28] sm:%s411] %v430
                %v432 = vld [vmem:[%s418 + $0x30] sm:%s411]
                %433 = vst [vmem:[%s419 + $0x30] sm:%s411] %v432
                %v434 = vld [vmem:[%s418 + $0x38] sm:%s411]
                %435 = vst [vmem:[%s419 + $0x38] sm:%s411] %v434
                %v436 = vld [vmem:[%s418 + $0x40] sm:%s411]
                %437 = vst [vmem:[%s419 + $0x40] sm:%s411] %v436
                %v438 = vld [vmem:[%s418 + $0x48] sm:%s411]
                %439 = vst [vmem:[%s419 + $0x48] sm:%s411] %v438
                %v440 = vld [vmem:[%s418 + $0x50] sm:%s411]
                %441 = vst [vmem:[%s419 + $0x50] sm:%s411] %v440
                %v442 = vld [vmem:[%s418 + $0x58] sm:%s411]
                %443 = vst [vmem:[%s419 + $0x58] sm:%s411] %v442
                %v444 = vld [vmem:[%s418 + $0x60] sm:%s411]
                %445 = vst [vmem:[%s419 + $0x60] sm:%s411] %v444
                %v446 = vld [vmem:[%s418 + $0x68] sm:%s411]
                %447 = vst [vmem:[%s419 + $0x68] sm:%s411] %v446
                %v448 = vld [vmem:[%s418 + $0x70] sm:%s411]
                %449 = vst [vmem:[%s419 + $0x70] sm:%s411] %v448
                %v450 = vld [vmem:[%s418 + $0x78] sm:%s411]
                %451 = vst [vmem:[%s419 + $0x78] sm:%s411] %v450
                %v452 = vld [vmem:[%s418 + $0x100] sm:%s411]
                %453 = vst [vmem:[%s419 + $0x80] sm:%s411] %v452
                %v454 = vld [vmem:[%s418 + $0x108] sm:%s411]
                %455 = vst [vmem:[%s419 + $0x88] sm:%s411] %v454
                %v456 = vld [vmem:[%s418 + $0x110] sm:%s411]
                %457 = vst [vmem:[%s419 + $0x90] sm:%s411] %v456
                %v458 = vld [vmem:[%s418 + $0x118] sm:%s411]
                %459 = vst [vmem:[%s419 + $0x98] sm:%s411] %v458
                %v460 = vld [vmem:[%s418 + $0x120] sm:%s411]
                %461 = vst [vmem:[%s419 + $0xa0] sm:%s411] %v460
                %v462 = vld [vmem:[%s418 + $0x128] sm:%s411]
                %463 = vst [vmem:[%s419 + $0xa8] sm:%s411] %v462
                %v464 = vld [vmem:[%s418 + $0x130] sm:%s411]
                %465 = vst [vmem:[%s419 + $0xb0] sm:%s411] %v464
                %v466 = vld [vmem:[%s418 + $0x138] sm:%s411]
                %467 = vst [vmem:[%s419 + $0xb8] sm:%s411] %v466
                %v468 = vld [vmem:[%s418 + $0x140] sm:%s411]
                %469 = vst [vmem:[%s419 + $0xc0] sm:%s411] %v468
                %v470 = vld [vmem:[%s418 + $0x148] sm:%s411]
                %471 = vst [vmem:[%s419 + $0xc8] sm:%s411] %v470
                %v472 = vld [vmem:[%s418 + $0x150] sm:%s411]
                %473 = vst [vmem:[%s419 + $0xd0] sm:%s411] %v472
                %v474 = vld [vmem:[%s418 + $0x158] sm:%s411]
                %475 = vst [vmem:[%s419 + $0xd8] sm:%s411] %v474
                %v476 = vld [vmem:[%s418 + $0x160] sm:%s411]
                %477 = vst [vmem:[%s419 + $0xe0] sm:%s411] %v476
                %v478 = vld [vmem:[%s418 + $0x168] sm:%s411]
                %479 = vst [vmem:[%s419 + $0xe8] sm:%s411] %v478
                %v480 = vld [vmem:[%s418 + $0x170] sm:%s411]
                %481 = vst [vmem:[%s419 + $0xf0] sm:%s411] %v480
                %v482 = vld [vmem:[%s418 + $0x178] sm:%s411]
                %483 = vst [vmem:[%s419 + $0xf8] sm:%s411] %v482
                %v484 = vld [vmem:[%s418 + $0x200] sm:%s411]
                %485 = vst [vmem:[%s419 + $0x100] sm:%s411] %v484
                %v486 = vld [vmem:[%s418 + $0x208] sm:%s411]
                %487 = vst [vmem:[%s419 + $0x108] sm:%s411] %v486
                %v488 = vld [vmem:[%s418 + $0x210] sm:%s411]
                %489 = vst [vmem:[%s419 + $0x110] sm:%s411] %v488
                %v490 = vld [vmem:[%s418 + $0x218] sm:%s411]
                %491 = vst [vmem:[%s419 + $0x118] sm:%s411] %v490
                %v492 = vld [vmem:[%s418 + $0x220] sm:%s411]
                %493 = vst [vmem:[%s419 + $0x120] sm:%s411] %v492
                %v494 = vld [vmem:[%s418 + $0x228] sm:%s411]
                %495 = vst [vmem:[%s419 + $0x128] sm:%s411] %v494
                %v496 = vld [vmem:[%s418 + $0x230] sm:%s411]
                %497 = vst [vmem:[%s419 + $0x130] sm:%s411] %v496
                %v498 = vld [vmem:[%s418 + $0x238] sm:%s411]
                %499 = vst [vmem:[%s419 + $0x138] sm:%s411] %v498
                %v500 = vld [vmem:[%s418 + $0x240] sm:%s411]
                %501 = vst [vmem:[%s419 + $0x140] sm:%s411] %v500
                %v502 = vld [vmem:[%s418 + $0x248] sm:%s411]
                %503 = vst [vmem:[%s419 + $0x148] sm:%s411] %v502
                %v504 = vld [vmem:[%s418 + $0x250] sm:%s411]
                %505 = vst [vmem:[%s419 + $0x150] sm:%s411] %v504
                %v506 = vld [vmem:[%s418 + $0x258] sm:%s411]
                %507 = vst [vmem:[%s419 + $0x158] sm:%s411] %v506
                %v508 = vld [vmem:[%s418 + $0x260] sm:%s411]
                %509 = vst [vmem:[%s419 + $0x160] sm:%s411] %v508
                %v510 = vld [vmem:[%s418 + $0x268] sm:%s411]
                %511 = vst [vmem:[%s419 + $0x168] sm:%s411] %v510
                %v512 = vld [vmem:[%s418 + $0x270] sm:%s411]
                %513 = vst [vmem:[%s419 + $0x170] sm:%s411] %v512
                %v514 = vld [vmem:[%s418 + $0x278] sm:%s411]
                %515 = vst [vmem:[%s419 + $0x178] sm:%s411] %v514
                %v516 = vld [vmem:[%s418 + $0x300] sm:%s411]
                %517 = vst [vmem:[%s419 + $0x180] sm:%s411] %v516
                %v518 = vld [vmem:[%s418 + $0x308] sm:%s411]
                %519 = vst [vmem:[%s419 + $0x188] sm:%s411] %v518
                %v520 = vld [vmem:[%s418 + $0x310] sm:%s411]
                %521 = vst [vmem:[%s419 + $0x190] sm:%s411] %v520
                %v522 = vld [vmem:[%s418 + $0x318] sm:%s411]
                %523 = vst [vmem:[%s419 + $0x198] sm:%s411] %v522
                %v524 = vld [vmem:[%s418 + $0x320] sm:%s411]
                %525 = vst [vmem:[%s419 + $0x1a0] sm:%s411] %v524
                %v526 = vld [vmem:[%s418 + $0x328] sm:%s411]
                %527 = vst [vmem:[%s419 + $0x1a8] sm:%s411] %v526
                %v528 = vld [vmem:[%s418 + $0x330] sm:%s411]
                %529 = vst [vmem:[%s419 + $0x1b0] sm:%s411] %v528
                %v530 = vld [vmem:[%s418 + $0x338] sm:%s411]
                %531 = vst [vmem:[%s419 + $0x1b8] sm:%s411] %v530
                %v532 = vld [vmem:[%s418 + $0x340] sm:%s411]
                %533 = vst [vmem:[%s419 + $0x1c0] sm:%s411] %v532
                %v534 = vld [vmem:[%s418 + $0x348] sm:%s411]
                %535 = vst [vmem:[%s419 + $0x1c8] sm:%s411] %v534
                %v536 = vld [vmem:[%s418 + $0x350] sm:%s411]
                %537 = vst [vmem:[%s419 + $0x1d0] sm:%s411] %v536
                %v538 = vld [vmem:[%s418 + $0x358] sm:%s411]
                %539 = vst [vmem:[%s419 + $0x1d8] sm:%s411] %v538
                %v540 = vld [vmem:[%s418 + $0x360] sm:%s411]
                %541 = vst [vmem:[%s419 + $0x1e0] sm:%s411] %v540
                %v542 = vld [vmem:[%s418 + $0x368] sm:%s411]
                %543 = vst [vmem:[%s419 + $0x1e8] sm:%s411] %v542
                %v544 = vld [vmem:[%s418 + $0x370] sm:%s411]
                %545 = vst [vmem:[%s419 + $0x1f0] sm:%s411] %v544
                %v546 = vld [vmem:[%s418 + $0x378] sm:%s411]
                %547 = vst [vmem:[%s419 + $0x1f8] sm:%s411] %v546
                %v548 = vld [vmem:[%s418 + $0x400] sm:%s411]
                %549 = vst [vmem:[%s419 + $0x200] sm:%s411] %v548
                %v550 = vld [vmem:[%s418 + $0x408] sm:%s411]
                %551 = vst [vmem:[%s419 + $0x208] sm:%s411] %v550
                %v552 = vld [vmem:[%s418 + $0x410] sm:%s411]
                %553 = vst [vmem:[%s419 + $0x210] sm:%s411] %v552
                %v554 = vld [vmem:[%s418 + $0x418] sm:%s411]
                %555 = vst [vmem:[%s419 + $0x218] sm:%s411] %v554
                %v556 = vld [vmem:[%s418 + $0x420] sm:%s411]
                %557 = vst [vmem:[%s419 + $0x220] sm:%s411] %v556
                %v558 = vld [vmem:[%s418 + $0x428] sm:%s411]
                %559 = vst [vmem:[%s419 + $0x228] sm:%s411] %v558
                %v560 = vld [vmem:[%s418 + $0x430] sm:%s411]
                %561 = vst [vmem:[%s419 + $0x230] sm:%s411] %v560
                %v562 = vld [vmem:[%s418 + $0x438] sm:%s411]
                %563 = vst [vmem:[%s419 + $0x238] sm:%s411] %v562
                %v564 = vld [vmem:[%s418 + $0x440] sm:%s411]
                %565 = vst [vmem:[%s419 + $0x240] sm:%s411] %v564
                %v566 = vld [vmem:[%s418 + $0x448] sm:%s411]
                %567 = vst [vmem:[%s419 + $0x248] sm:%s411] %v566
                %v568 = vld [vmem:[%s418 + $0x450] sm:%s411]
                %569 = vst [vmem:[%s419 + $0x250] sm:%s411] %v568
                %v570 = vld [vmem:[%s418 + $0x458] sm:%s411]
                %571 = vst [vmem:[%s419 + $0x258] sm:%s411] %v570
                %v572 = vld [vmem:[%s418 + $0x460] sm:%s411]
                %573 = vst [vmem:[%s419 + $0x260] sm:%s411] %v572
                %v574 = vld [vmem:[%s418 + $0x468] sm:%s411]
                %575 = vst [vmem:[%s419 + $0x268] sm:%s411] %v574
                %v576 = vld [vmem:[%s418 + $0x470] sm:%s411]
                %577 = vst [vmem:[%s419 + $0x270] sm:%s411] %v576
                %v578 = vld [vmem:[%s418 + $0x478] sm:%s411]
                %579 = vst [vmem:[%s419 + $0x278] sm:%s411] %v578
                %v580 = vld [vmem:[%s418 + $0x500] sm:%s411]
                %581 = vst [vmem:[%s419 + $0x280] sm:%s411] %v580
                %v582 = vld [vmem:[%s418 + $0x508] sm:%s411]
                %583 = vst [vmem:[%s419 + $0x288] sm:%s411] %v582
                %v584 = vld [vmem:[%s418 + $0x510] sm:%s411]
                %585 = vst [vmem:[%s419 + $0x290] sm:%s411] %v584
                %v586 = vld [vmem:[%s418 + $0x518] sm:%s411]
                %587 = vst [vmem:[%s419 + $0x298] sm:%s411] %v586
                %v588 = vld [vmem:[%s418 + $0x520] sm:%s411]
                %589 = vst [vmem:[%s419 + $0x2a0] sm:%s411] %v588
                %v590 = vld [vmem:[%s418 + $0x528] sm:%s411]
                %591 = vst [vmem:[%s419 + $0x2a8] sm:%s411] %v590
                %v592 = vld [vmem:[%s418 + $0x530] sm:%s411]
                %593 = vst [vmem:[%s419 + $0x2b0] sm:%s411] %v592
                %v594 = vld [vmem:[%s418 + $0x538] sm:%s411]
                %595 = vst [vmem:[%s419 + $0x2b8] sm:%s411] %v594
                %v596 = vld [vmem:[%s418 + $0x540] sm:%s411]
                %597 = vst [vmem:[%s419 + $0x2c0] sm:%s411] %v596
                %v598 = vld [vmem:[%s418 + $0x548] sm:%s411]
                %599 = vst [vmem:[%s419 + $0x2c8] sm:%s411] %v598
                %v600 = vld [vmem:[%s418 + $0x550] sm:%s411]
                %601 = vst [vmem:[%s419 + $0x2d0] sm:%s411] %v600
                %v602 = vld [vmem:[%s418 + $0x558] sm:%s411]
                %603 = vst [vmem:[%s419 + $0x2d8] sm:%s411] %v602
                %v604 = vld [vmem:[%s418 + $0x560] sm:%s411]
                %605 = vst [vmem:[%s419 + $0x2e0] sm:%s411] %v604
                %v606 = vld [vmem:[%s418 + $0x568] sm:%s411]
                %607 = vst [vmem:[%s419 + $0x2e8] sm:%s411] %v606
                %v608 = vld [vmem:[%s418 + $0x570] sm:%s411]
                %609 = vst [vmem:[%s419 + $0x2f0] sm:%s411] %v608
                %v610 = vld [vmem:[%s418 + $0x578] sm:%s411]
                %611 = vst [vmem:[%s419 + $0x2f8] sm:%s411] %v610
              $region73: #{tpu_custom_call.1} parent=67 // loop_footer
                %s417 = sadd.s32 1, %s413
              $region74: #{tpu_custom_call.1} parent=67 // loop_footer_branch
                %412 = sbr.rel target = $region70
              $region75: #{tpu_custom_call.1} parent=67 // loop_exit
                _
            $region68: #{tpu_custom_call.1} parent=59 // pred_fallthru
              _
          $region60: #{tpu_custom_call.1} parent=55 // pred_fallthru
            _
          %816 = vnop
        $region56: #{tpu_custom_call.1} parent=35 // pred_fallthru
          _
      $region36: #{tpu_custom_call.1} parent=5 // pred_fallthru
        _
      %p817 = scmp.le.s32.totalorder 1, %s21
      %p818 = scmp.lt.s32.totalorder %s21, 5
      %p819 = pnand %p817, %p818
      %p820 = pneg %p819
      // Predicated region
      $region91: #{tpu_custom_call.1} parent=5 // pred_check
        _
      $region92: #{tpu_custom_call.1} parent=5 // pred_check_branch
        %822 = sbr.rel (%p819) target = $region94
      $region93: #{tpu_custom_call.1} parent=5 // pred_region
        %s823 = ssub.s32 %s21, 1
        // Predicated region
        $region95: #{tpu_custom_call.1} parent=93 // pred_check
          %p824 = pneg %p166
        $region96: #{tpu_custom_call.1} parent=93 // pred_check_branch
          %826 = sbr.rel (%p824) target = $region98
        $region97: #{tpu_custom_call.1} parent=93 // pred_region
          %828 = dma.done [#allocation5], 128
        $region98: #{tpu_custom_call.1} parent=93 // pred_fallthru
          _
        // Predicated region
        $region99: #{tpu_custom_call.1} parent=93 // pred_check
          %p829 = pneg %p187
        $region100: #{tpu_custom_call.1} parent=93 // pred_check_branch
          %831 = sbr.rel (%p829) target = $region102
        $region101: #{tpu_custom_call.1} parent=93 // pred_region
          %833 = dma.done [#allocation7], 16
        $region102: #{tpu_custom_call.1} parent=93 // pred_fallthru
          _
        %s834 = sand.u32 %s200, 1
        %s835 = sand.u32 %s200, 1
        %s836 = smul.addr %s835, 768
        %s837 = scalar_lea.vmem [#allocation8], %s836
        // Predicated region
        $region103: #{tpu_custom_call.1} parent=93 // pred_check
          %p838 = pneg %p213
        $region104: #{tpu_custom_call.1} parent=93 // pred_check_branch
          %840 = sbr.rel (%p838) target = $region106
        $region105: #{tpu_custom_call.1} parent=93 // pred_region
          _
        $region106: #{tpu_custom_call.1} parent=93 // pred_fallthru
          _
        %841 = sfence
        %p842 = scmp.lt.s32.totalorder %s30, 1
        %s843 = scalar_select %p842, %s30, 1
        %p844 = scmp.lt.s32.totalorder %s31, 1
        %s845 = scalar_select %p844, %s31, 1
        %s846 = smul.addr %s843, 2
        %s847 = sadd.s32 %s845, %s846
        %s848 = smul.addr %s847, 8
        %s849 = scalar_lea.vmem %s0, %s848
        %p850 = pneg %p61
        %p851 = pneg %p58
        %p852 = scmp.lt.s32.totalorder %s30, 1
        %s853 = scalar_select %p852, %s30, 1
        %p854 = scmp.lt.s32.totalorder %s31, 1
        %s855 = scalar_select %p854, %s31, 1
        %s856 = smul.addr %s853, 2
        %s857 = sadd.s32 %s855, %s856
        %s858 = smul.addr %s857, 8
        %s859 = scalar_lea.vmem %s1, %s858
        %p860 = pneg %p89
        %p861 = pneg %p86
        %p862 = scmp.lt.s32.totalorder %s30, 1
        %s863 = scalar_select %p862, %s30, 1
        %p864 = scmp.lt.s32.totalorder %s31, 1
        %s865 = scalar_select %p864, %s31, 1
        %s866 = smul.addr %s863, 2
        %s867 = sadd.s32 %s865, %s866
        %s868 = smul.addr %s867, 8
        %s869 = scalar_lea.vmem %s2, %s868
        %p870 = pneg %p117
        %p871 = pneg %p114
        %p872 = scmp.lt.s32.totalorder %s30, 1
        %s873 = scalar_select %p872, %s30, 1
        %p874 = scmp.lt.s32.totalorder %s31, 1
        %s875 = scalar_select %p874, %s31, 1
        %s876 = smul.addr %s873, 2
        %s877 = sadd.s32 %s875, %s876
        %s878 = smul.addr %s877, 8
        %s879 = scalar_lea.vmem %s3, %s878
        %p880 = pneg %p145
        %p881 = pneg %p142
        %p882 = pneg %p166
        %p883 = pneg %p163
        %p884 = pneg %p187
        %p885 = pneg %p184
        %s886 = sand.u32 %s200, 1
        %s887 = sand.u32 %s200, 1
        %s888 = smul.addr %s887, 768
        %s889 = scalar_lea.vmem [#allocation8], %s888
        %p890 = pneg %p213
        %p891 = pneg %p210
        %p892 = pneg %p234
        %p893 = pneg %p231
        %p894 = pneg %p255
        %p895 = pneg %p252
        %p896 = pneg %p276
        %p897 = pneg %p273
        %p898 = pneg %p302
        %p899 = pneg %p299
        %s900 = sand.u32 %s289, 1
        %s901 = scalar_lea.sflag [#allocation4], %s900
        %s902 = sand.u32 %s289, 1
        %s903 = smul.addr %s902, 8
        %s904 = scalar_lea.vmem [#allocation9], %s903
        %p905 = scmp.lt.s32.totalorder %s30, 1
        %s906 = scalar_select %p905, %s30, 1
        %p907 = scmp.lt.s32.totalorder %s31, 1
        %s908 = scalar_select %p907, %s31, 1
        %s909 = smul.addr %s906, 2
        %s910 = sadd.s32 %s908, %s909
        %s911 = smul.addr %s910, 8
        %s912 = scalar_lea.vmem %s0, %s911
        %p913 = scmp.lt.s32.totalorder %s30, 1
        %s914 = scalar_select %p913, %s30, 1
        %p915 = scmp.lt.s32.totalorder %s31, 1
        %s916 = scalar_select %p915, %s31, 1
        %s917 = smul.addr %s914, 2
        %s918 = sadd.s32 %s916, %s917
        %s919 = smul.addr %s918, 8
        %s920 = scalar_lea.vmem %s1, %s919
        %p921 = scmp.lt.s32.totalorder %s30, 1
        %s922 = scalar_select %p921, %s30, 1
        %p923 = scmp.lt.s32.totalorder %s31, 1
        %s924 = scalar_select %p923, %s31, 1
        %s925 = smul.addr %s922, 2
        %s926 = sadd.s32 %s924, %s925
        %s927 = smul.addr %s926, 8
        %s928 = scalar_lea.vmem %s2, %s927
        %p929 = scmp.lt.s32.totalorder %s30, 1
        %s930 = scalar_select %p929, %s30, 1
        %p931 = scmp.lt.s32.totalorder %s31, 1
        %s932 = scalar_select %p931, %s31, 1
        %s933 = smul.addr %s930, 2
        %s934 = sadd.s32 %s932, %s933
        %s935 = smul.addr %s934, 8
        %s936 = scalar_lea.vmem %s3, %s935
        %s937 = smul.u32 16, %s31
        %p938 = scmp.eq.s32.totalorder %s31, 0
        // Predicated region
        $region107: #{tpu_custom_call.1} parent=93 // pred_check
          %p939 = pneg %p938
        $region108: #{tpu_custom_call.1} parent=93 // pred_check_branch
          %941 = sbr.rel (%p939) target = $region110
        $region109: #{tpu_custom_call.1} parent=93 // pred_region
          %vm942 = vcmask 261120
          %943 = vst.msk [vmem:[#allocation2] sm:$0xff] %vm942, 0.0
        $region110: #{tpu_custom_call.1} parent=93 // pred_fallthru
          _
        %v944 = vld [vmem:[%s912] sm:$0xff]
        %v945 = vld [vmem:[%s920] sm:$0xff]
        %v946 = vld [vmem:[%s928] sm:$0xff]
        %v947 = vld [vmem:[%s936] sm:$0xff]
        %s948 = sld [smem:[#allocation3]]
        %s949 = sld [smem:[#allocation3 + $0x1]]
        %s950 = sld [smem:[#allocation3 + $0x2]]
        %s951 = sld [smem:[#allocation6]]
        %v952 = vstv %s948
        %v953 = vmul.f32 %v952, %v944
        %v954 = vstv %s949
        %v955 = vmul.f32 %v954, %v945
        %v956 = vadd.f32 %v953, %v955
        %v957 = vstv %s950
        %v958 = vmul.f32 %v957, %v946
        %v959 = vadd.f32 %v956, %v958
        %v960 = vstv %s951
        %v961 = vadd.f32 %v959, %v960
        %v962 = vmul.f32 %v952, %v945
        %v963 = vmul.f32 %v954, %v946
        %v964 = vadd.f32 %v962, %v963
        %v965 = vmul.f32 %v957, %v947
        %v966 = vadd.f32 %v964, %v965
        %v967 = vadd.f32 %v966, %v960
        %v968 = vmax.f32 %v961, %v967
        %v969 = vmax.f32 %v968, 0.0
        %v970 = vld [vmem:[%s837] sm:$0xff]
        %v971 = vld [vmem:[%s837 + $0x8] sm:$0xff]
        %v972 = vld [vmem:[%s837 + $0x10] sm:$0xff]
        %v973 = vld [vmem:[%s837 + $0x18] sm:$0xff]
        %v974 = vld [vmem:[%s837 + $0x20] sm:$0xff]
        %v975 = vld [vmem:[%s837 + $0x28] sm:$0xff]
        %v976 = vld [vmem:[%s837 + $0x30] sm:$0xff]
        %v977 = vld [vmem:[%s837 + $0x38] sm:$0xff]
        %v978 = vld [vmem:[%s837 + $0x40] sm:$0xff]
        %v979 = vld [vmem:[%s837 + $0x48] sm:$0xff]
        %v980 = vld [vmem:[%s837 + $0x50] sm:$0xff]
        %v981 = vld [vmem:[%s837 + $0x58] sm:$0xff]
        %v982 = vld [vmem:[%s837 + $0x60] sm:$0xff]
        %v983 = vld [vmem:[%s837 + $0x68] sm:$0xff]
        %v984 = vld [vmem:[%s837 + $0x70] sm:$0xff]
        %v985 = vld [vmem:[%s837 + $0x78] sm:$0xff]
        %s986 = sld [smem:[#allocation3 + $0x80]]
        %s987 = sld [smem:[#allocation3 + $0x81]]
        %s988 = sld [smem:[#allocation3 + $0x82]]
        %s989 = sld [smem:[#allocation6 + $0x1]]
        %v990 = vstv %s986
        %v991 = vmul.f32 %v990, %v944
        %v992 = vstv %s987
        %v993 = vmul.f32 %v992, %v945
        %v994 = vadd.f32 %v991, %v993
        %v995 = vstv %s988
        %v996 = vmul.f32 %v995, %v946
        %v997 = vadd.f32 %v994, %v996
        %v998 = vstv %s989
        %v999 = vadd.f32 %v997, %v998
        %v1000 = vmul.f32 %v990, %v945
        %v1001 = vmul.f32 %v992, %v946
        %v1002 = vadd.f32 %v1000, %v1001
        %v1003 = vmul.f32 %v995, %v947
        %v1004 = vadd.f32 %v1002, %v1003
        %v1005 = vadd.f32 %v1004, %v998
        %v1006 = vmax.f32 %v999, %v1005
        %v1007 = vmax.f32 %v1006, 0.0
        %s1008 = scalar_lea.vmem %s837, 128 [#allocation8]
        %v1009 = vld [vmem:[%s1008] sm:$0xff]
        %v1010 = vld [vmem:[%s1008 + $0x8] sm:$0xff]
        %v1011 = vld [vmem:[%s1008 + $0x10] sm:$0xff]
        %v1012 = vld [vmem:[%s1008 + $0x18] sm:$0xff]
        %v1013 = vld [vmem:[%s1008 + $0x20] sm:$0xff]
        %v1014 = vld [vmem:[%s1008 + $0x28] sm:$0xff]
        %v1015 = vld [vmem:[%s1008 + $0x30] sm:$0xff]
        %v1016 = vld [vmem:[%s1008 + $0x38] sm:$0xff]
        %v1017 = vld [vmem:[%s1008 + $0x40] sm:$0xff]
        %v1018 = vld [vmem:[%s1008 + $0x48] sm:$0xff]
        %v1019 = vld [vmem:[%s1008 + $0x50] sm:$0xff]
        %v1020 = vld [vmem:[%s1008 + $0x58] sm:$0xff]
        %v1021 = vld [vmem:[%s1008 + $0x60] sm:$0xff]
        %v1022 = vld [vmem:[%s1008 + $0x68] sm:$0xff]
        %v1023 = vld [vmem:[%s1008 + $0x70] sm:$0xff]
        %v1024 = vld [vmem:[%s1008 + $0x78] sm:$0xff]
        %1025 = vmatpush.msra.mxu0 %v1024
        %1026 = vmatpush.msra.mxu0 %v1023
        %1027 = vmatpush.msra.mxu0 %v1022
        %1028 = vmatpush.msra.mxu0 %v1021
        %1029 = vmatpush.msra.mxu0 %v1020
        %1030 = vmatpush.msra.mxu0 %v1019
        %1031 = vmatpush.msra.mxu0 %v1018
        %1032 = vmatpush.msra.mxu0 %v1017
        %1033 = vmatpush.msra.mxu0 %v1016
        %1034 = vmatpush.msra.mxu0 %v1015
        %1035 = vmatpush.msra.mxu0 %v1014
        %1036 = vmatpush.msra.mxu0 %v1013
        %1037 = vmatpush.msra.mxu0 %v1012
        %1038 = vmatpush.msra.mxu0 %v1011
        %1039 = vmatpush.msra.mxu0 %v1010
        %1040 = vmatpush.msra.mxu0 %v1009
        %1041 = vmatmul.f32.gmra.mxu0 %v1007
        %v1042 = vpop.f32.mrf.mxu0
        %v1043 = vadd.f32 0.0, %v1042
        %1044 = vdwg.mxu0
        %1045 = vmatpush.msra.mxu0 %v985
        %1046 = vmatpush.msra.mxu0 %v984
        %1047 = vmatpush.msra.mxu0 %v983
        %1048 = vmatpush.msra.mxu0 %v982
        %1049 = vmatpush.msra.mxu0 %v981
        %1050 = vmatpush.msra.mxu0 %v980
        %1051 = vmatpush.msra.mxu0 %v979
        %1052 = vmatpush.msra.mxu0 %v978
        %1053 = vmatpush.msra.mxu0 %v977
        %1054 = vmatpush.msra.mxu0 %v976
        %1055 = vmatpush.msra.mxu0 %v975
        %1056 = vmatpush.msra.mxu0 %v974
        %1057 = vmatpush.msra.mxu0 %v973
        %1058 = vmatpush.msra.mxu0 %v972
        %1059 = vmatpush.msra.mxu0 %v971
        %1060 = vmatpush.msra.mxu0 %v970
        %1061 = vmatmul.f32.gmra.mxu0 %v969
        %v1062 = vpop.f32.mrf.mxu0
        %v1063 = vadd.f32 %v1043, %v1062
        %1064 = vdwg.mxu0
        %s1065 = sld [smem:[#allocation3 + $0x100]]
        %s1066 = sld [smem:[#allocation3 + $0x101]]
        %s1067 = sld [smem:[#allocation3 + $0x102]]
        %s1068 = sld [smem:[#allocation6 + $0x2]]
        %v1069 = vstv %s1065
        %v1070 = vmul.f32 %v1069, %v944
        %v1071 = vstv %s1066
        %v1072 = vmul.f32 %v1071, %v945
        %v1073 = vadd.f32 %v1070, %v1072
        %v1074 = vstv %s1067
        %v1075 = vmul.f32 %v1074, %v946
        %v1076 = vadd.f32 %v1073, %v1075
        %v1077 = vstv %s1068
        %v1078 = vadd.f32 %v1076, %v1077
        %v1079 = vmul.f32 %v1069, %v945
        %v1080 = vmul.f32 %v1071, %v946
        %v1081 = vadd.f32 %v1079, %v1080
        %v1082 = vmul.f32 %v1074, %v947
        %v1083 = vadd.f32 %v1081, %v1082
        %v1084 = vadd.f32 %v1083, %v1077
        %v1085 = vmax.f32 %v1078, %v1084
        %v1086 = vmax.f32 %v1085, 0.0
        %s1087 = scalar_lea.vmem %s837, 256 [#allocation8]
        %v1088 = vld [vmem:[%s1087] sm:$0xff]
        %v1089 = vld [vmem:[%s1087 + $0x8] sm:$0xff]
        %v1090 = vld [vmem:[%s1087 + $0x10] sm:$0xff]
        %v1091 = vld [vmem:[%s1087 + $0x18] sm:$0xff]
        %v1092 = vld [vmem:[%s1087 + $0x20] sm:$0xff]
        %v1093 = vld [vmem:[%s1087 + $0x28] sm:$0xff]
        %v1094 = vld [vmem:[%s1087 + $0x30] sm:$0xff]
        %v1095 = vld [vmem:[%s1087 + $0x38] sm:$0xff]
        %v1096 = vld [vmem:[%s1087 + $0x40] sm:$0xff]
        %v1097 = vld [vmem:[%s1087 + $0x48] sm:$0xff]
        %v1098 = vld [vmem:[%s1087 + $0x50] sm:$0xff]
        %v1099 = vld [vmem:[%s1087 + $0x58] sm:$0xff]
        %v1100 = vld [vmem:[%s1087 + $0x60] sm:$0xff]
        %v1101 = vld [vmem:[%s1087 + $0x68] sm:$0xff]
        %v1102 = vld [vmem:[%s1087 + $0x70] sm:$0xff]
        %v1103 = vld [vmem:[%s1087 + $0x78] sm:$0xff]
        %1104 = vmatpush.msra.mxu0 %v1103
        %1105 = vmatpush.msra.mxu0 %v1102
        %1106 = vmatpush.msra.mxu0 %v1101
        %1107 = vmatpush.msra.mxu0 %v1100
        %1108 = vmatpush.msra.mxu0 %v1099
        %1109 = vmatpush.msra.mxu0 %v1098
        %1110 = vmatpush.msra.mxu0 %v1097
        %1111 = vmatpush.msra.mxu0 %v1096
        %1112 = vmatpush.msra.mxu0 %v1095
        %1113 = vmatpush.msra.mxu0 %v1094
        %1114 = vmatpush.msra.mxu0 %v1093
        %1115 = vmatpush.msra.mxu0 %v1092
        %1116 = vmatpush.msra.mxu0 %v1091
        %1117 = vmatpush.msra.mxu0 %v1090
        %1118 = vmatpush.msra.mxu0 %v1089
        %1119 = vmatpush.msra.mxu0 %v1088
        %1120 = vmatmul.f32.gmra.mxu0 %v1086
        %v1121 = vpop.f32.mrf.mxu0
        %v1122 = vadd.f32 0.0, %v1121
        %1123 = vdwg.mxu0
        %v1124 = vadd.f32 %v1063, %v1122
        %s1125 = sld [smem:[#allocation3 + $0x180]]
        %s1126 = sld [smem:[#allocation3 + $0x181]]
        %s1127 = sld [smem:[#allocation3 + $0x182]]
        %s1128 = sld [smem:[#allocation6 + $0x3]]
        %v1129 = vstv %s1125
        %v1130 = vmul.f32 %v1129, %v944
        %v1131 = vstv %s1126
        %v1132 = vmul.f32 %v1131, %v945
        %v1133 = vadd.f32 %v1130, %v1132
        %v1134 = vstv %s1127
        %v1135 = vmul.f32 %v1134, %v946
        %v1136 = vadd.f32 %v1133, %v1135
        %v1137 = vstv %s1128
        %v1138 = vadd.f32 %v1136, %v1137
        %v1139 = vmul.f32 %v1129, %v945
        %v1140 = vmul.f32 %v1131, %v946
        %v1141 = vadd.f32 %v1139, %v1140
        %v1142 = vmul.f32 %v1134, %v947
        %v1143 = vadd.f32 %v1141, %v1142
        %v1144 = vadd.f32 %v1143, %v1137
        %v1145 = vmax.f32 %v1138, %v1144
        %v1146 = vmax.f32 %v1145, 0.0
        %s1147 = scalar_lea.vmem %s837, 384 [#allocation8]
        %v1148 = vld [vmem:[%s1147] sm:$0xff]
        %v1149 = vld [vmem:[%s1147 + $0x8] sm:$0xff]
        %v1150 = vld [vmem:[%s1147 + $0x10] sm:$0xff]
        %v1151 = vld [vmem:[%s1147 + $0x18] sm:$0xff]
        %v1152 = vld [vmem:[%s1147 + $0x20] sm:$0xff]
        %v1153 = vld [vmem:[%s1147 + $0x28] sm:$0xff]
        %v1154 = vld [vmem:[%s1147 + $0x30] sm:$0xff]
        %v1155 = vld [vmem:[%s1147 + $0x38] sm:$0xff]
        %v1156 = vld [vmem:[%s1147 + $0x40] sm:$0xff]
        %v1157 = vld [vmem:[%s1147 + $0x48] sm:$0xff]
        %v1158 = vld [vmem:[%s1147 + $0x50] sm:$0xff]
        %v1159 = vld [vmem:[%s1147 + $0x58] sm:$0xff]
        %v1160 = vld [vmem:[%s1147 + $0x60] sm:$0xff]
        %v1161 = vld [vmem:[%s1147 + $0x68] sm:$0xff]
        %v1162 = vld [vmem:[%s1147 + $0x70] sm:$0xff]
        %v1163 = vld [vmem:[%s1147 + $0x78] sm:$0xff]
        %1164 = vmatpush.msra.mxu0 %v1163
        %1165 = vmatpush.msra.mxu0 %v1162
        %1166 = vmatpush.msra.mxu0 %v1161
        %1167 = vmatpush.msra.mxu0 %v1160
        %1168 = vmatpush.msra.mxu0 %v1159
        %1169 = vmatpush.msra.mxu0 %v1158
        %1170 = vmatpush.msra.mxu0 %v1157
        %1171 = vmatpush.msra.mxu0 %v1156
        %1172 = vmatpush.msra.mxu0 %v1155
        %1173 = vmatpush.msra.mxu0 %v1154
        %1174 = vmatpush.msra.mxu0 %v1153
        %1175 = vmatpush.msra.mxu0 %v1152
        %1176 = vmatpush.msra.mxu0 %v1151
        %1177 = vmatpush.msra.mxu0 %v1150
        %1178 = vmatpush.msra.mxu0 %v1149
        %1179 = vmatpush.msra.mxu0 %v1148
        %1180 = vmatmul.f32.gmra.mxu0 %v1146
        %v1181 = vpop.f32.mrf.mxu0
        %v1182 = vadd.f32 0.0, %v1181
        %1183 = vdwg.mxu0
        %v1184 = vadd.f32 %v1124, %v1182
        %s1185 = sld [smem:[#allocation3 + $0x200]]
        %s1186 = sld [smem:[#allocation3 + $0x201]]
        %s1187 = sld [smem:[#allocation3 + $0x202]]
        %s1188 = sld [smem:[#allocation6 + $0x4]]
        %v1189 = vstv %s1185
        %v1190 = vmul.f32 %v1189, %v944
        %v1191 = vstv %s1186
        %v1192 = vmul.f32 %v1191, %v945
        %v1193 = vadd.f32 %v1190, %v1192
        %v1194 = vstv %s1187
        %v1195 = vmul.f32 %v1194, %v946
        %v1196 = vadd.f32 %v1193, %v1195
        %v1197 = vstv %s1188
        %v1198 = vadd.f32 %v1196, %v1197
        %v1199 = vmul.f32 %v1189, %v945
        %v1200 = vmul.f32 %v1191, %v946
        %v1201 = vadd.f32 %v1199, %v1200
        %v1202 = vmul.f32 %v1194, %v947
        %v1203 = vadd.f32 %v1201, %v1202
        %v1204 = vadd.f32 %v1203, %v1197
        %v1205 = vmax.f32 %v1198, %v1204
        %v1206 = vmax.f32 %v1205, 0.0
        %s1207 = scalar_lea.vmem %s837, 512 [#allocation8]
        %v1208 = vld [vmem:[%s1207] sm:$0xff]
        %v1209 = vld [vmem:[%s1207 + $0x8] sm:$0xff]
        %v1210 = vld [vmem:[%s1207 + $0x10] sm:$0xff]
        %v1211 = vld [vmem:[%s1207 + $0x18] sm:$0xff]
        %v1212 = vld [vmem:[%s1207 + $0x20] sm:$0xff]
        %v1213 = vld [vmem:[%s1207 + $0x28] sm:$0xff]
        %v1214 = vld [vmem:[%s1207 + $0x30] sm:$0xff]
        %v1215 = vld [vmem:[%s1207 + $0x38] sm:$0xff]
        %v1216 = vld [vmem:[%s1207 + $0x40] sm:$0xff]
        %v1217 = vld [vmem:[%s1207 + $0x48] sm:$0xff]
        %v1218 = vld [vmem:[%s1207 + $0x50] sm:$0xff]
        %v1219 = vld [vmem:[%s1207 + $0x58] sm:$0xff]
        %v1220 = vld [vmem:[%s1207 + $0x60] sm:$0xff]
        %v1221 = vld [vmem:[%s1207 + $0x68] sm:$0xff]
        %v1222 = vld [vmem:[%s1207 + $0x70] sm:$0xff]
        %v1223 = vld [vmem:[%s1207 + $0x78] sm:$0xff]
        %1224 = vmatpush.msra.mxu0 %v1223
        %1225 = vmatpush.msra.mxu0 %v1222
        %1226 = vmatpush.msra.mxu0 %v1221
        %1227 = vmatpush.msra.mxu0 %v1220
        %1228 = vmatpush.msra.mxu0 %v1219
        %1229 = vmatpush.msra.mxu0 %v1218
        %1230 = vmatpush.msra.mxu0 %v1217
        %1231 = vmatpush.msra.mxu0 %v1216
        %1232 = vmatpush.msra.mxu0 %v1215
        %1233 = vmatpush.msra.mxu0 %v1214
        %1234 = vmatpush.msra.mxu0 %v1213
        %1235 = vmatpush.msra.mxu0 %v1212
        %1236 = vmatpush.msra.mxu0 %v1211
        %1237 = vmatpush.msra.mxu0 %v1210
        %1238 = vmatpush.msra.mxu0 %v1209
        %1239 = vmatpush.msra.mxu0 %v1208
        %1240 = vmatmul.f32.gmra.mxu0 %v1206
        %v1241 = vpop.f32.mrf.mxu0
        %v1242 = vadd.f32 0.0, %v1241
        %1243 = vdwg.mxu0
        %v1244 = vadd.f32 %v1184, %v1242
        %s1245 = sld [smem:[#allocation3 + $0x280]]
        %s1246 = sld [smem:[#allocation3 + $0x281]]
        %s1247 = sld [smem:[#allocation3 + $0x282]]
        %s1248 = sld [smem:[#allocation6 + $0x5]]
        %v1249 = vstv %s1245
        %v1250 = vmul.f32 %v1249, %v944
        %v1251 = vstv %s1246
        %v1252 = vmul.f32 %v1251, %v945
        %v1253 = vadd.f32 %v1250, %v1252
        %v1254 = vstv %s1247
        %v1255 = vmul.f32 %v1254, %v946
        %v1256 = vadd.f32 %v1253, %v1255
        %v1257 = vstv %s1248
        %v1258 = vadd.f32 %v1256, %v1257
        %v1259 = vmul.f32 %v1249, %v945
        %v1260 = vmul.f32 %v1251, %v946
        %v1261 = vadd.f32 %v1259, %v1260
        %v1262 = vmul.f32 %v1254, %v947
        %v1263 = vadd.f32 %v1261, %v1262
        %v1264 = vadd.f32 %v1263, %v1257
        %v1265 = vmax.f32 %v1258, %v1264
        %v1266 = vmax.f32 %v1265, 0.0
        %s1267 = scalar_lea.vmem %s837, 640 [#allocation8]
        %v1268 = vld [vmem:[%s1267] sm:$0xff]
        %v1269 = vld [vmem:[%s1267 + $0x8] sm:$0xff]
        %v1270 = vld [vmem:[%s1267 + $0x10] sm:$0xff]
        %v1271 = vld [vmem:[%s1267 + $0x18] sm:$0xff]
        %v1272 = vld [vmem:[%s1267 + $0x20] sm:$0xff]
        %v1273 = vld [vmem:[%s1267 + $0x28] sm:$0xff]
        %v1274 = vld [vmem:[%s1267 + $0x30] sm:$0xff]
        %v1275 = vld [vmem:[%s1267 + $0x38] sm:$0xff]
        %v1276 = vld [vmem:[%s1267 + $0x40] sm:$0xff]
        %v1277 = vld [vmem:[%s1267 + $0x48] sm:$0xff]
        %v1278 = vld [vmem:[%s1267 + $0x50] sm:$0xff]
        %v1279 = vld [vmem:[%s1267 + $0x58] sm:$0xff]
        %v1280 = vld [vmem:[%s1267 + $0x60] sm:$0xff]
        %v1281 = vld [vmem:[%s1267 + $0x68] sm:$0xff]
        %v1282 = vld [vmem:[%s1267 + $0x70] sm:$0xff]
        %v1283 = vld [vmem:[%s1267 + $0x78] sm:$0xff]
        %1284 = vmatpush.msra.mxu0 %v1283
        %1285 = vmatpush.msra.mxu0 %v1282
        %1286 = vmatpush.msra.mxu0 %v1281
        %1287 = vmatpush.msra.mxu0 %v1280
        %1288 = vmatpush.msra.mxu0 %v1279
        %1289 = vmatpush.msra.mxu0 %v1278
        %1290 = vmatpush.msra.mxu0 %v1277
        %1291 = vmatpush.msra.mxu0 %v1276
        %1292 = vmatpush.msra.mxu0 %v1275
        %1293 = vmatpush.msra.mxu0 %v1274
        %1294 = vmatpush.msra.mxu0 %v1273
        %1295 = vmatpush.msra.mxu0 %v1272
        %1296 = vmatpush.msra.mxu0 %v1271
        %1297 = vmatpush.msra.mxu0 %v1270
        %1298 = vmatpush.msra.mxu0 %v1269
        %1299 = vmatpush.msra.mxu0 %v1268
        %1300 = vmatmul.f32.gmra.mxu0 %v1266
        %v1301 = vpop.f32.mrf.mxu0
        %v1302 = vadd.f32 0.0, %v1301
        %1303 = vdwg.mxu0
        %v1304 = vadd.f32 %v1244, %v1302
        %v1305 = vld [vmem:[#allocation2] sm:$0xff]
        %v1306 = vadd.f32 %v1305, %v1304
        %vm1307 = vcmask 261120
        %1308 = vst.msk [vmem:[#allocation2] sm:$0xff] %vm1307, %v1306
        %p1309 = scmp.eq.s32.totalorder %s31, 1
        // Predicated region
        $region111: #{tpu_custom_call.1} parent=93 // pred_check
          %p1310 = pneg %p1309
        $region112: #{tpu_custom_call.1} parent=93 // pred_check_branch
          %1312 = sbr.rel (%p1310) target = $region114
        $region113: #{tpu_custom_call.1} parent=93 // pred_region
          %v1313 = vld [vmem:[#allocation2] sm:$0xff]
          %v1314 = vld [vmem:[%s7] sm:$0x1]
          %v1316 = vperm.slane %v1314, 0
          %v1318 = vadd.f32 %v1313, %v1316
          %v1319 = vmax.f32 %v1318, 0.0
          %v1320 = vld [vmem:[%s8] sm:$0xff]
          %v1321 = vld [vmem:[%s8 + $0x8] sm:$0xff]
          %v1322 = vld [vmem:[%s8 + $0x10] sm:$0xff]
          %v1323 = vld [vmem:[%s8 + $0x18] sm:$0xff]
          %v1324 = vld [vmem:[%s9] sm:$0x1]
          %v1326 = vperm.slane %v1324, 0
          %v1329 = vsel %vm1307, %v1319, 0
          %1331 = vmatpush.msra.mxu0 0.0
          %1332 = vmatpush.msra.mxu0 0.0
          %1333 = vmatpush.msra.mxu0 0.0
          %1334 = vmatpush.msra.mxu0 0.0
          %1335 = vmatpush.msra.mxu0 0.0
          %1336 = vmatpush.msra.mxu0 0.0
          %1337 = vmatpush.msra.mxu0 0.0
          %1338 = vmatpush.msra.mxu0 0.0
          %1339 = vmatpush.msra.mxu0 0.0
          %1340 = vmatpush.msra.mxu0 0.0
          %1341 = vmatpush.msra.mxu0 0.0
          %1342 = vmatpush.msra.mxu0 0.0
          %1343 = vmatpush.msra.mxu0 %v1323
          %1344 = vmatpush.msra.mxu0 %v1322
          %1345 = vmatpush.msra.mxu0 %v1321
          %1346 = vmatpush.msra.mxu0 %v1320
          %1347 = vmatmul.f32.gmra.mxu0 %v1329
          %v1348 = vpop.f32.mrf.mxu0
          %v1349 = vadd.f32 %v1326, %v1348
          %1350 = vdwg.mxu0
          %1351 = vst [vmem:[%s904] sm:$0xff] %v1349
        $region114: #{tpu_custom_call.1} parent=93 // pred_fallthru
          _
        %s1352 = sand.u32 %s289, 1
        %s1353 = scalar_lea.sflag [#allocation4], %s1352
        %s1354 = sand.u32 %s289, 1
        %s1355 = smul.addr %s1354, 8
        %s1356 = scalar_lea.vmem [#allocation9], %s1355
        // Predicated region
        $region115: #{tpu_custom_call.1} parent=93 // pred_check
          %p1357 = pneg %p299
        $region116: #{tpu_custom_call.1} parent=93 // pred_check_branch
          %1359 = sbr.rel (%p1357) target = $region118
        $region117: #{tpu_custom_call.1} parent=93 // pred_region
          %1361 = vsyncadd %s1353, 0
          %s1362 = smul.addr %s30, 8
          %s1363 = scalar_lea.hbm %s10, %s1362
          %s1365 = sshll.u32 %s1356, 4
          %s1366 = int_to_ptr.vmem [resolvable:$true] %s1365
          %s1367 = sshll.u32 %s1363, 4
          %s1368 = int_to_ptr.hbm [resolvable:$true] %s1367
          %1370 = dma.vmem_to_hbm [thread:$0]  %s1366, 128, %s1368, %s1353
        $region118: #{tpu_custom_call.1} parent=93 // pred_fallthru
          _
      $region94: #{tpu_custom_call.1} parent=5 // pred_fallthru
        _
      %p1371 = scmp.le.s32.totalorder 2, %s21
      // Predicated region
      $region119: #{tpu_custom_call.1} parent=5 // pred_check
        %p1372 = pneg %p1371
      $region120: #{tpu_custom_call.1} parent=5 // pred_check_branch
        %1374 = sbr.rel (%p1372) target = $region122
      $region121: #{tpu_custom_call.1} parent=5 // pred_region
        %s1375 = ssub.s32 %s21, 2
        // Predicated region
        $region123: #{tpu_custom_call.1} parent=121 // pred_check
          %p1376 = pneg %p305
        $region124: #{tpu_custom_call.1} parent=121 // pred_check_branch
          %1378 = sbr.rel (%p1376) target = $region126
        $region125: #{tpu_custom_call.1} parent=121 // pred_region
          %s1379 = sand.u32 %s290, 1
          %s1380 = scalar_lea.sflag [#allocation4], %s1379
          %s1381 = sand.u32 %s290, 1
          %s1382 = smul.addr %s1381, 8
          %s1383 = scalar_lea.vmem [#allocation9], %s1382
          %1385 = dma.done %s1380, 128
        $region126: #{tpu_custom_call.1} parent=121 // pred_fallthru
          _
      $region122: #{tpu_custom_call.1} parent=5 // pred_fallthru
        _
    $region6: #{tpu_custom_call.1} parent=1 // loop_footer
      %s25 = sadd.s32 1, %s21
    $region7: #{tpu_custom_call.1} parent=1 // loop_footer_branch
      %20 = sbr.rel target = $region3
    $region8: #{tpu_custom_call.1} parent=1 // loop_exit
      _
    %1386 = vsyncpa [#allocation4], 1
    %s1387 = scalar_lea.sflag [#allocation4], 1
    %1388 = vsyncpa %s1387, 1
    %1389 = vsyncpa [#allocation5], 1
    %s1390 = scalar_lea.sflag [#allocation5], 1
    %1391 = vsyncpa %s1390, 1
    %1392 = vsyncpa [#allocation7], 1

</llo_original>
